<compile_context>
chip_gen: v5e
topology: v5e:2x2
jax: 0.10.0
libtpu: 0.0.40
codegen_flags: <defaults>
</compile_context>

<pallas_src>
from functools import partial

import jax
import jax.numpy as jnp
from jax.experimental import pallas as pl
from jax.experimental.pallas import tpu as pltpu


def _affine_coupling_kernel(xcol_ref, in_b_ref,
                            w1_ref, b1_ref, w2_ref, b2_ref,
                            w3s_ref, b3_ref, gate_ref, tap1_ref,
                            out_b_ref, ld_ref,
                            pcol_ref,
                            *, mm_dtype):
    TH, W, Ch = out_b_ref.shape          # row-tile height, width, half channels
    Cout = b3_ref.shape[1]               # = in_channel (affine=True)
    THE = TH + 2                         # extended rows (1-row halo top+bottom)
    tile = pl.program_id(1)
    n_tiles = pl.num_programs(1)

    # ---- conv1: 3x3 / zero padding (folded into im2col by the wrapper) + ReLU
    x2d = xcol_ref[...]                                            # (THE*W, 9*Cin)
    h1 = jnp.dot(x2d.astype(mm_dtype), w1_ref[...].astype(mm_dtype),
                 preferred_element_type=jnp.float32) + b1_ref[...]
    h1 = jnp.maximum(h1, 0.0)

    # ---- conv2: 1x1 conv (pure matmul) + ReLU ----
    h2 = jnp.dot(h1.astype(mm_dtype), w2_ref[...].astype(mm_dtype),
                 preferred_element_type=jnp.float32) + b2_ref[...]
    h2 = jnp.maximum(h2, 0.0)

    # ---- ZeroConv2d: single matmul against the 9 taps stacked along N ----
    # p[r, tap*Cout + o] = sum_f h2[r, f] * w3[tap, f, o]
    p = jnp.dot(h2.astype(mm_dtype), w3s_ref[...].astype(mm_dtype),
                preferred_element_type=jnp.float32)                # (THE*W, 9*Cout)
    p3 = p.reshape(THE, W, 9 * Cout)

    # Border-only "pad with ones" handling in the cheap (9*Cout)-wide domain:
    # the contribution of a value-1 source pixel for tap (dy,dx) is
    # tap1[tap] = sum_f w3[dy,dx,f,:].  Only the 1-pixel ring needs it.
    tap1 = tap1_ref[...]                                           # (1, 9*Cout)
    pcol_ref[:, 1:W + 1, :] = p3
    col_ones = jnp.broadcast_to(tap1.reshape(1, 1, 9 * Cout), (THE, 1, 9 * Cout))
    pcol_ref[:, 0:1, :] = col_ones
    pcol_ref[:, W + 1:W + 2, :] = col_ones
    row_ones = jnp.broadcast_to(tap1.reshape(1, 1, 9 * Cout), (1, W + 2, 9 * Cout))

    @pl.when(tile == 0)                       # global image top padding row
    def _():
        pcol_ref[0:1, :, :] = row_ones

    @pl.when(tile == n_tiles - 1)             # global image bottom padding row
    def _():
        pcol_ref[TH + 1:TH + 2, :, :] = row_ones

    # 9 shifted adds of small (TH, W, Cout) slabs (cheap VPU work).
    acc = jnp.zeros((TH, W, Cout), jnp.float32)
    for dy in range(3):
        for dx in range(3):
            tap = dy * 3 + dx
            acc = acc + pcol_ref[dy:dy + TH, dx:dx + W,
                                 tap * Cout:(tap + 1) * Cout]

    net = (acc + b3_ref[...].reshape(1, 1, Cout)) * gate_ref[...].reshape(1, 1, Cout)

    # ---- affine coupling tail (numerically stable sigmoid / log-sigmoid) ----
    log_s = net[:, :, :Ch]
    t_shift = net[:, :, Ch:]
    z = log_s + 2.0
    e = jnp.exp(-jnp.abs(z))                 # e in (0, 1]: no overflow
    # pl.reciprocal(..., approx=True) is the production choice (EUP slot);
    # exact kept here to preserve 1e-3 parity with the f32 reference.
    r = pl.reciprocal(1.0 + e, approx=False)
    s = jnp.where(z >= 0.0, r, e * r)        # = sigmoid(z)
    log_sig = jnp.minimum(z, 0.0) - jnp.log(1.0 + e)   # = log(sigmoid(z)), stable

    out_b_ref[...] = (in_b_ref[...] + t_shift) * s
    ld_ref[...] = jnp.sum(log_sig, axis=0)   # (W, Ch) per-tile logdet partial


def affine_coupling_forward(x_nchw, params, *, row_tile=8, mm_dtype=jnp.float32):
    """Forward pass of AffineCoupling (affine=True). Returns (out_nchw, logdet)."""
    B, C, H, W = x_nchw.shape
    Ch = C // 2
    Cin = Ch
    Cout = C
    w1_hwio, b1, w2_io, b2, w3_hwio, b3, scale = params
    Fs = w1_hwio.shape[-1]

    TH = row_tile if (H % row_tile == 0) else H
    n_tiles = H // TH

    in_a = x_nchw[:, :Ch]
    in_b = x_nchw[:, Ch:]
    in_a_nhwc = jnp.transpose(in_a, (0, 2, 3, 1))                  # (B,H,W,Cin)
    in_b_nhwc = jnp.transpose(in_b, (0, 2, 3, 1))                  # (B,H,W,Ch)

    # im2col for conv1 (zero padding): xcol[b,y,x] = concat_{dy,dx} xa_pad[b,y+dy,x+dx,:]
    xa_pad = jnp.pad(in_a_nhwc, ((0, 0), (1, 1), (1, 1), (0, 0)))
    patches = [xa_pad[:, dy:dy + H, dx:dx + W, :]
               for dy in range(3) for dx in range(3)]
    xcol = jnp.concatenate(patches, axis=-1)                       # (B,H,W,9*Cin)

    # Per-row-tile view with a 1-row halo on each side.  Rows outside the image
    # are zero; their h2 values are never used (the kernel overwrites the
    # corresponding padded rows with the value-1 padding contribution).
    xcol_rows = jnp.pad(xcol, ((0, 0), (1, 1), (0, 0), (0, 0)))    # (B,H+2,W,9Cin)
    ridx = jnp.arange(n_tiles)[:, None] * TH + jnp.arange(TH + 2)[None, :]
    xcol_tiles = xcol_rows[:, ridx]                                # (B,nt,TH+2,W,9Cin)
    xcol_tiles = xcol_tiles.reshape(B, n_tiles, (TH + 2) * W, 9 * Cin)

    # Kernel-layout parameters.
    w1col = w1_hwio.reshape(9 * Cin, Fs)                           # taps folded into K
    w3stk = jnp.transpose(w3_hwio, (2, 0, 1, 3)).reshape(Fs, 9 * Cout)  # taps along N
    tap1 = jnp.sum(w3_hwio, axis=2).reshape(1, 9 * Cout)           # ones-pad contribution
    gate = jnp.exp(scale * 3.0).reshape(1, Cout)

    def wspec(shape):
        return pl.BlockSpec(shape, lambda b, t: (0,) * len(shape))

    kernel = partial(_affine_coupling_kernel, mm_dtype=mm_dtype)

    out_b_nhwc, ld_part = pl.pallas_call(
        kernel,
        grid=(B, n_tiles),
        in_specs=[
            pl.BlockSpec((None, None, (TH + 2) * W, 9 * Cin),
                         lambda b, t: (b, t, 0, 0)),
            pl.BlockSpec((None, TH, W, Ch), lambda b, t: (b, t, 0, 0)),
            wspec((9 * Cin, Fs)),
            wspec((1, Fs)),
            wspec((Fs, Fs)),
            wspec((1, Fs)),
            wspec((Fs, 9 * Cout)),
            wspec((1, Cout)),
            wspec((1, Cout)),
            wspec((1, 9 * Cout)),
        ],
        out_specs=(
            pl.BlockSpec((None, TH, W, Ch), lambda b, t: (b, t, 0, 0)),
            pl.BlockSpec((None, None, W, Ch), lambda b, t: (b, t, 0, 0)),
        ),
        out_shape=(jax.ShapeDtypeStruct((B, H, W, Ch), jnp.float32),
                   jax.ShapeDtypeStruct((B, n_tiles, W, Ch), jnp.float32)),
        scratch_shapes=[pltpu.VMEM((TH + 2, W + 2, 9 * Cout), jnp.float32)],
        compiler_params=pltpu.CompilerParams(
            dimension_semantics=("parallel", "parallel"),
            vmem_limit_bytes=32 * 1024 * 1024),
    )(xcol_tiles, in_b_nhwc, w1col, b1.reshape(1, Fs), w2_io, b2.reshape(1, Fs),
      w3stk, b3.reshape(1, Cout), gate, tap1)

    out_b = jnp.transpose(out_b_nhwc, (0, 3, 1, 2))
    out = jnp.concatenate([in_a, out_b], axis=1)
    logdet = jnp.sum(ld_part, axis=(1, 2, 3))
    return out, logdet


def _reference_forward(x, w1, b1, w2, b2, w3, b3, scale):
    """Pure-JAX (NCHW, OIHW) reference matching the PyTorch module."""
    B, C, H, W = x.shape
    Ch = C // 2
    in_a, in_b = x[:, :Ch], x[:, Ch:]
    conv = partial(jax.lax.conv_general_dilated,
                   window_strides=(1, 1),
                   dimension_numbers=('NCHW', 'OIHW', 'NCHW'),
                   precision=jax.lax.Precision.HIGHEST)
    h = jax.nn.relu(conv(in_a, w1, padding=((1, 1), (1, 1)))
                    + b1[None, :, None, None])
    h = jax.nn.relu(conv(h, w2, padding=((0, 0), (0, 0)))
                    + b2[None, :, None, None])
    hp = jnp.pad(h, ((0, 0), (0, 0), (1, 1), (1, 1)), constant_values=1.0)
    net = (conv(hp, w3, padding=((0, 0), (0, 0)))
           + b3[None, :, None, None]) * jnp.exp(scale * 3.0)[None, :, None, None]
    log_s, t = net[:, :Ch], net[:, Ch:]
    s = jax.nn.sigmoid(log_s + 2.0)
    out_b = (in_b + t) * s
    logdet = jnp.sum(jnp.log(s).reshape(B, -1), axis=1)
    return jnp.concatenate([in_a, out_b], axis=1), logdet


if __name__ == "__main__":
    B, C, H, W = 2, 4, 16, 16       # in_channel = 4
    Fs = 32                         # filter_size (small for the demo)
    Ch = C // 2

    key = jax.random.PRNGKey(0)
    k1, k2, k3, k4, k5, kx = jax.random.split(key, 6)

    # PyTorch-layout (OIHW) parameters, deterministic init.
    w1_oihw = 0.05 * jax.random.normal(k1, (Fs, Ch, 3, 3), jnp.float32)
    b1 = jnp.zeros((Fs,), jnp.float32)
    w2_oihw = 0.05 * jax.random.normal(k2, (Fs, Fs, 1, 1), jnp.float32)
    b2 = jnp.zeros((Fs,), jnp.float32)
    # NOTE: the PyTorch module zero-inits ZeroConv2d (weights/bias/scale); small
    # deterministic non-zero values are used so the full path is exercised.
    w3_oihw = 0.01 * jax.random.normal(k3, (C, Fs, 3, 3), jnp.float32)
    b3 = 0.01 * jax.random.normal(k4, (C,), jnp.float32)
    scale = 0.01 * jax.random.normal(k5, (C,), jnp.float32)

    x = jax.random.normal(kx, (B, C, H, W), jnp.float32)

    # Wrapper-layout parameters: conv weights as (kh, kw, in, out); 1-D biases/scale.
    params = (
        jnp.transpose(w1_oihw, (2, 3, 1, 0)),          # (3, 3, Ch, Fs)
        b1,
        jnp.transpose(w2_oihw[:, :, 0, 0], (1, 0)),    # (Fs_in, Fs_out)
        b2,
        jnp.transpose(w3_oihw, (2, 3, 1, 0)),          # (3, 3, Fs, C)
        b3,
        scale,
    )

    fwd = jax.jit(affine_coupling_forward)
    out, logdet = fwd(x, params)
    out, logdet = jax.block_until_ready((out, logdet))

    ref_out, ref_logdet = _reference_forward(x, w1_oihw, b1, w2_oihw, b2,
                                             w3_oihw, b3, scale)
    assert jnp.allclose(out, ref_out, rtol=1e-3, atol=1e-3), "output mismatch"
    assert jnp.allclose(logdet, ref_logdet, rtol=1e-3, atol=1e-3), "logdet mismatch"
    print("KERNEL_OK")
</pallas_src>

<mosaic_0001>
module attributes {stable_mosaic.version = 11 : i64} {
  func.func @_affine_coupling_kernel(%arg0: i32, %arg1: i32, %arg2: memref<1x1x160x18xf32, #tpu.memory_space<vmem>>, %arg3: memref<1x8x16x2xf32, #tpu.memory_space<vmem>>, %arg4: memref<18x32xf32, #tpu.memory_space<vmem>>, %arg5: memref<1x32xf32, #tpu.memory_space<vmem>>, %arg6: memref<32x32xf32, #tpu.memory_space<vmem>>, %arg7: memref<1x32xf32, #tpu.memory_space<vmem>>, %arg8: memref<32x36xf32, #tpu.memory_space<vmem>>, %arg9: memref<1x4xf32, #tpu.memory_space<vmem>>, %arg10: memref<1x4xf32, #tpu.memory_space<vmem>>, %arg11: memref<1x36xf32, #tpu.memory_space<vmem>>, %arg12: memref<1x8x16x2xf32, #tpu.memory_space<vmem>>, %arg13: memref<1x1x16x2xf32, #tpu.memory_space<vmem>>, %arg14: memref<10x18x36xf32, #tpu.memory_space<vmem>>) attributes {dimension_semantics = [#tpu.dimension_semantics<parallel>, #tpu.dimension_semantics<parallel>], iteration_bounds = array<i64: 2, 2>, scalar_prefetch = 0 : i64, scratch_operands = 1 : i64, tpu.core_type = #tpu.core_type<tc>, window_params = [{transform_indices = @transform_0, window_bounds = array<i64: 1, 1, 160, 18>}, {transform_indices = @transform_1, window_bounds = array<i64: 1, 8, 16, 2>}, {pipeline_mode = #tpu.pipeline_mode<synchronous>, transform_indices = @transform_2, window_bounds = array<i64: 18, 32>}, {pipeline_mode = #tpu.pipeline_mode<synchronous>, transform_indices = @transform_3, window_bounds = array<i64: 1, 32>}, {pipeline_mode = #tpu.pipeline_mode<synchronous>, transform_indices = @transform_4, window_bounds = array<i64: 32, 32>}, {pipeline_mode = #tpu.pipeline_mode<synchronous>, transform_indices = @transform_5, window_bounds = array<i64: 1, 32>}, {pipeline_mode = #tpu.pipeline_mode<synchronous>, transform_indices = @transform_6, window_bounds = array<i64: 32, 36>}, {pipeline_mode = #tpu.pipeline_mode<synchronous>, transform_indices = @transform_7, window_bounds = array<i64: 1, 4>}, {pipeline_mode = #tpu.pipeline_mode<synchronous>, transform_indices = @transform_8, window_bounds = array<i64: 1, 4>}, {pipeline_mode = #tpu.pipeline_mode<synchronous>, transform_indices = @transform_9, window_bounds = array<i64: 1, 36>}, {transform_indices = @transform_10, window_bounds = array<i64: 1, 8, 16, 2>}, {transform_indices = @transform_11, window_bounds = array<i64: 1, 1, 16, 2>}]} {
    %c0 = arith.constant 0 : index
    %c0_0 = arith.constant 0 : index
    %c0_1 = arith.constant 0 : index
    %c0_2 = arith.constant 0 : index
    %0 = vector.load %arg2[%c0, %c0_0, %c0_1, %c0_2] : memref<1x1x160x18xf32, #tpu.memory_space<vmem>>, vector<1x1x160x18xf32>
    %1 = vector.shape_cast %0 : vector<1x1x160x18xf32> to vector<160x18xf32>
    %c0_3 = arith.constant 0 : index
    %c0_4 = arith.constant 0 : index
    %2 = vector.load %arg4[%c0_3, %c0_4] : memref<18x32xf32, #tpu.memory_space<vmem>>, vector<18x32xf32>
    %cst = arith.constant dense<0.000000e+00> : vector<160x32xf32>
    %3 = tpu.matmul %1, %2, %cst {dimension_numbers = #tpu.dot_dimension_numbers<[1], [0], [0], [1], [0, 0, 1, 1], [], []>} : vector<160x18xf32>, vector<18x32xf32>, vector<160x32xf32> -> vector<160x32xf32>
    %c0_5 = arith.constant 0 : index
    %c0_6 = arith.constant 0 : index
    %4 = vector.load %arg5[%c0_5, %c0_6] : memref<1x32xf32, #tpu.memory_space<vmem>>, vector<1x32xf32>
    %5 = vector.broadcast %4 : vector<1x32xf32> to vector<160x32xf32>
    %6 = arith.addf %3, %5 : vector<160x32xf32>
    %cst_7 = arith.constant 0.000000e+00 : f32
    %7 = vector.broadcast %cst_7 : f32 to vector<160x32xf32>
    %8 = arith.maximumf %6, %7 : vector<160x32xf32>
    %c0_8 = arith.constant 0 : index
    %c0_9 = arith.constant 0 : index
    %9 = vector.load %arg6[%c0_8, %c0_9] : memref<32x32xf32, #tpu.memory_space<vmem>>, vector<32x32xf32>
    %cst_10 = arith.constant dense<0.000000e+00> : vector<160x32xf32>
    %10 = tpu.matmul %8, %9, %cst_10 {dimension_numbers = #tpu.dot_dimension_numbers<[1], [0], [0], [1], [0, 0, 1, 1], [], []>} : vector<160x32xf32>, vector<32x32xf32>, vector<160x32xf32> -> vector<160x32xf32>
    %c0_11 = arith.constant 0 : index
    %c0_12 = arith.constant 0 : index
    %11 = vector.load %arg7[%c0_11, %c0_12] : memref<1x32xf32, #tpu.memory_space<vmem>>, vector<1x32xf32>
    %12 = vector.broadcast %11 : vector<1x32xf32> to vector<160x32xf32>
    %13 = arith.addf %10, %12 : vector<160x32xf32>
    %cst_13 = arith.constant 0.000000e+00 : f32
    %14 = vector.broadcast %cst_13 : f32 to vector<160x32xf32>
    %15 = arith.maximumf %13, %14 : vector<160x32xf32>
    %c0_14 = arith.constant 0 : index
    %c0_15 = arith.constant 0 : index
    %16 = vector.load %arg8[%c0_14, %c0_15] : memref<32x36xf32, #tpu.memory_space<vmem>>, vector<32x36xf32>
    %cst_16 = arith.constant dense<0.000000e+00> : vector<160x36xf32>
    %17 = tpu.matmul %15, %16, %cst_16 {dimension_numbers = #tpu.dot_dimension_numbers<[1], [0], [0], [1], [0, 0, 1, 1], [], []>} : vector<160x32xf32>, vector<32x36xf32>, vector<160x36xf32> -> vector<160x36xf32>
    %18 = vector.shape_cast %17 : vector<160x36xf32> to vector<10x16x36xf32>
    %c0_17 = arith.constant 0 : index
    %c0_18 = arith.constant 0 : index
    %19 = vector.load %arg11[%c0_17, %c0_18] : memref<1x36xf32, #tpu.memory_space<vmem>>, vector<1x36xf32>
    %c0_19 = arith.constant 0 : index
    %c1 = arith.constant 1 : index
    %c0_20 = arith.constant 0 : index
    %20 = vector.load %arg14[%c0_19, %c1, %c0_20] : memref<10x18x36xf32, #tpu.memory_space<vmem>>, vector<10x16x36xf32>
    tpu.vector_store %arg14[%c0_19, %c1, %c0_20], %18 {strides = array<i32>} : memref<10x18x36xf32, #tpu.memory_space<vmem>>, vector<10x16x36xf32>,
    %21 = vector.shape_cast %19 : vector<1x36xf32> to vector<1x1x36xf32>
    %22 = vector.shape_cast %21 : vector<1x1x36xf32> to vector<1x1x36xf32>
    %23 = vector.broadcast %22 : vector<1x1x36xf32> to vector<10x1x36xf32>
    %c0_21 = arith.constant 0 : index
    %c0_22 = arith.constant 0 : index
    %c0_23 = arith.constant 0 : index
    %24 = vector.load %arg14[%c0_21, %c0_22, %c0_23] : memref<10x18x36xf32, #tpu.memory_space<vmem>>, vector<10x1x36xf32>
    tpu.vector_store %arg14[%c0_21, %c0_22, %c0_23], %23 {strides = array<i32>} : memref<10x18x36xf32, #tpu.memory_space<vmem>>, vector<10x1x36xf32>,
    %c0_24 = arith.constant 0 : index
    %c17 = arith.constant 17 : index
    %c0_25 = arith.constant 0 : index
    %25 = vector.load %arg14[%c0_24, %c17, %c0_25] : memref<10x18x36xf32, #tpu.memory_space<vmem>>, vector<10x1x36xf32>
    tpu.vector_store %arg14[%c0_24, %c17, %c0_25], %23 {strides = array<i32>} : memref<10x18x36xf32, #tpu.memory_space<vmem>>, vector<10x1x36xf32>,
    %26 = vector.shape_cast %19 : vector<1x36xf32> to vector<1x1x36xf32>
    %27 = vector.shape_cast %26 : vector<1x1x36xf32> to vector<1x1x36xf32>
    %28 = vector.broadcast %27 : vector<1x1x36xf32> to vector<1x18x36xf32>
    %c0_i32 = arith.constant 0 : i32
    %29 = arith.cmpi eq, %arg1, %c0_i32 : i32
    %30 = arith.extui %29 : i1 to i32
    %c0_i32_26 = arith.constant 0 : i32
    %31 = arith.cmpi ne, %30, %c0_i32_26 : i32
    scf.if %31 {
      %c0_70 = arith.constant 0 : index
      %c0_71 = arith.constant 0 : index
      %c0_72 = arith.constant 0 : index
      %94 = vector.load %arg14[%c0_70, %c0_71, %c0_72] : memref<10x18x36xf32, #tpu.memory_space<vmem>>, vector<1x18x36xf32>
      tpu.vector_store %arg14[%c0_70, %c0_71, %c0_72], %28 {strides = array<i32>} : memref<10x18x36xf32, #tpu.memory_space<vmem>>, vector<1x18x36xf32>,
    } else {
    }
    %c1_i32 = arith.constant 1 : i32
    %32 = arith.cmpi eq, %arg1, %c1_i32 : i32
    %33 = arith.extui %32 : i1 to i32
    %c0_i32_27 = arith.constant 0 : i32
    %34 = arith.cmpi ne, %33, %c0_i32_27 : i32
    scf.if %34 {
      %c9 = arith.constant 9 : index
      %c0_70 = arith.constant 0 : index
      %c0_71 = arith.constant 0 : index
      %94 = vector.load %arg14[%c9, %c0_70, %c0_71] : memref<10x18x36xf32, #tpu.memory_space<vmem>>, vector<1x18x36xf32>
      tpu.vector_store %arg14[%c9, %c0_70, %c0_71], %28 {strides = array<i32>} : memref<10x18x36xf32, #tpu.memory_space<vmem>>, vector<1x18x36xf32>,
    } else {
    }
    %cst_28 = arith.constant 0.000000e+00 : f32
    %35 = vector.broadcast %cst_28 : f32 to vector<8x16x4xf32>
    %c0_29 = arith.constant 0 : index
    %c0_30 = arith.constant 0 : index
    %c0_31 = arith.constant 0 : index
    %36 = vector.load %arg14[%c0_29, %c0_30, %c0_31] : memref<10x18x36xf32, #tpu.memory_space<vmem>>, vector<8x16x4xf32>
    %37 = arith.addf %35, %36 : vector<8x16x4xf32>
    %c0_32 = arith.constant 0 : index
    %c1_33 = arith.constant 1 : index
    %c4 = arith.constant 4 : index
    %38 = vector.load %arg14[%c0_32, %c1_33, %c4] : memref<10x18x36xf32, #tpu.memory_space<vmem>>, vector<8x16x4xf32>
    %39 = arith.addf %37, %38 : vector<8x16x4xf32>
    %c0_34 = arith.constant 0 : index
    %c2 = arith.constant 2 : index
    %c8 = arith.constant 8 : index
    %40 = vector.load %arg14[%c0_34, %c2, %c8] : memref<10x18x36xf32, #tpu.memory_space<vmem>>, vector<8x16x4xf32>
    %41 = arith.addf %39, %40 : vector<8x16x4xf32>
    %c1_35 = arith.constant 1 : index
    %c0_36 = arith.constant 0 : index
    %c12 = arith.constant 12 : index
    %42 = vector.load %arg14[%c1_35, %c0_36, %c12] : memref<10x18x36xf32, #tpu.memory_space<vmem>>, vector<8x16x4xf32>
    %43 = arith.addf %41, %42 : vector<8x16x4xf32>
    %c1_37 = arith.constant 1 : index
    %c1_38 = arith.constant 1 : index
    %c16 = arith.constant 16 : index
    %44 = vector.load %arg14[%c1_37, %c1_38, %c16] : memref<10x18x36xf32, #tpu.memory_space<vmem>>, vector<8x16x4xf32>
    %45 = arith.addf %43, %44 : vector<8x16x4xf32>
    %c1_39 = arith.constant 1 : index
    %c2_40 = arith.constant 2 : index
    %c20 = arith.constant 20 : index
    %46 = vector.load %arg14[%c1_39, %c2_40, %c20] : memref<10x18x36xf32, #tpu.memory_space<vmem>>, vector<8x16x4xf32>
    %47 = arith.addf %45, %46 : vector<8x16x4xf32>
    %c2_41 = arith.constant 2 : index
    %c0_42 = arith.constant 0 : index
    %c24 = arith.constant 24 : index
    %48 = vector.load %arg14[%c2_41, %c0_42, %c24] : memref<10x18x36xf32, #tpu.memory_space<vmem>>, vector<8x16x4xf32>
    %49 = arith.addf %47, %48 : vector<8x16x4xf32>
    %c2_43 = arith.constant 2 : index
    %c1_44 = arith.constant 1 : index
    %c28 = arith.constant 28 : index
    %50 = vector.load %arg14[%c2_43, %c1_44, %c28] : memref<10x18x36xf32, #tpu.memory_space<vmem>>, vector<8x16x4xf32>
    %51 = arith.addf %49, %50 : vector<8x16x4xf32>
    %c2_45 = arith.constant 2 : index
    %c2_46 = arith.constant 2 : index
    %c32 = arith.constant 32 : index
    %52 = vector.load %arg14[%c2_45, %c2_46, %c32] : memref<10x18x36xf32, #tpu.memory_space<vmem>>, vector<8x16x4xf32>
    %53 = arith.addf %51, %52 : vector<8x16x4xf32>
    %c0_47 = arith.constant 0 : index
    %c0_48 = arith.constant 0 : index
    %54 = vector.load %arg9[%c0_47, %c0_48] : memref<1x4xf32, #tpu.memory_space<vmem>>, vector<1x4xf32>
    %55 = vector.shape_cast %54 : vector<1x4xf32> to vector<1x1x4xf32>
    %56 = vector.broadcast %55 : vector<1x1x4xf32> to vector<8x16x4xf32>
    %57 = arith.addf %53, %56 : vector<8x16x4xf32>
    %c0_49 = arith.constant 0 : index
    %c0_50 = arith.constant 0 : index
    %58 = vector.load %arg10[%c0_49, %c0_50] : memref<1x4xf32, #tpu.memory_space<vmem>>, vector<1x4xf32>
    %59 = vector.shape_cast %58 : vector<1x4xf32> to vector<1x1x4xf32>
    %60 = vector.broadcast %59 : vector<1x1x4xf32> to vector<8x16x4xf32>
    %61 = arith.mulf %57, %60 : vector<8x16x4xf32>
    %62 = vector.extract_strided_slice %61 {offsets = [0, 0, 0], sizes = [8, 16, 2], strides = [1, 1, 1]} : vector<8x16x4xf32> to vector<8x16x2xf32>
    %63 = vector.extract_strided_slice %61 {offsets = [0, 0, 2], sizes = [8, 16, 2], strides = [1, 1, 1]} : vector<8x16x4xf32> to vector<8x16x2xf32>
    %cst_51 = arith.constant 2.000000e+00 : f32
    %64 = vector.broadcast %cst_51 : f32 to vector<8x16x2xf32>
    %65 = arith.addf %62, %64 : vector<8x16x2xf32>
    %66 = math.absf %65 : vector<8x16x2xf32>
    %cst_52 = arith.constant 0.000000e+00 : f32
    %67 = vector.broadcast %cst_52 : f32 to vector<8x16x2xf32>
    %68 = arith.subf %67, %66 : vector<8x16x2xf32>
    %69 = math.exp %68 : vector<8x16x2xf32>
    %cst_53 = arith.constant 1.000000e+00 : f32
    %70 = vector.broadcast %cst_53 : f32 to vector<8x16x2xf32>
    %71 = arith.addf %70, %69 : vector<8x16x2xf32>
    %72 = tpu.reciprocal %71 : vector<8x16x2xf32> -> vector<8x16x2xf32>
    %cst_54 = arith.constant 0.000000e+00 : f32
    %73 = vector.broadcast %cst_54 : f32 to vector<8x16x2xf32>
    %74 = arith.cmpf oge, %65, %73 : vector<8x16x2xf32>
    %75 = arith.mulf %69, %72 : vector<8x16x2xf32>
    %76 = arith.select %74, %72, %75 : vector<8x16x2xi1>, vector<8x16x2xf32>
    %cst_55 = arith.constant 0.000000e+00 : f32
    %77 = vector.broadcast %cst_55 : f32 to vector<8x16x2xf32>
    %78 = arith.minimumf %65, %77 : vector<8x16x2xf32>
    %cst_56 = arith.constant 1.000000e+00 : f32
    %79 = vector.broadcast %cst_56 : f32 to vector<8x16x2xf32>
    %80 = arith.addf %79, %69 : vector<8x16x2xf32>
    %81 = math.log %80 : vector<8x16x2xf32>
    %82 = arith.subf %78, %81 : vector<8x16x2xf32>
    %c0_57 = arith.constant 0 : index
    %c0_58 = arith.constant 0 : index
    %c0_59 = arith.constant 0 : index
    %c0_60 = arith.constant 0 : index
    %83 = vector.load %arg3[%c0_57, %c0_58, %c0_59, %c0_60] : memref<1x8x16x2xf32, #tpu.memory_space<vmem>>, vector<1x8x16x2xf32>
    %84 = vector.shape_cast %83 : vector<1x8x16x2xf32> to vector<8x16x2xf32>
    %85 = arith.addf %84, %63 : vector<8x16x2xf32>
    %86 = arith.mulf %85, %76 : vector<8x16x2xf32>
    %c0_61 = arith.constant 0 : index
    %c0_62 = arith.constant 0 : index
    %c0_63 = arith.constant 0 : index
    %c0_64 = arith.constant 0 : index
    %87 = vector.load %arg12[%c0_61, %c0_62, %c0_63, %c0_64] : memref<1x8x16x2xf32, #tpu.memory_space<vmem>>, vector<1x8x16x2xf32>
    %88 = vector.shape_cast %87 : vector<1x8x16x2xf32> to vector<8x16x2xf32>
    %89 = vector.shape_cast %86 : vector<8x16x2xf32> to vector<1x8x16x2xf32>
    tpu.vector_store %arg12[%c0_61, %c0_62, %c0_63, %c0_64], %89 {strides = array<i32>} : memref<1x8x16x2xf32, #tpu.memory_space<vmem>>, vector<1x8x16x2xf32>,
    %cst_65 = arith.constant dense<0.000000e+00> : vector<16x2xf32>
    %90 = vector.multi_reduction <add>, %82, %cst_65 [0] : vector<8x16x2xf32> to vector<16x2xf32>
    %c0_66 = arith.constant 0 : index
    %c0_67 = arith.constant 0 : index
    %c0_68 = arith.constant 0 : index
    %c0_69 = arith.constant 0 : index
    %91 = vector.load %arg13[%c0_66, %c0_67, %c0_68, %c0_69] : memref<1x1x16x2xf32, #tpu.memory_space<vmem>>, vector<1x1x16x2xf32>
    %92 = vector.shape_cast %91 : vector<1x1x16x2xf32> to vector<16x2xf32>
    %93 = vector.shape_cast %90 : vector<16x2xf32> to vector<1x1x16x2xf32>
    tpu.vector_store %arg13[%c0_66, %c0_67, %c0_68, %c0_69], %93 {strides = array<i32>} : memref<1x1x16x2xf32, #tpu.memory_space<vmem>>, vector<1x1x16x2xf32>,
    return
  }
  func.func @transform_0(%arg0: i32, %arg1: i32) -> (i32, i32, i32, i32) {
    %c0_i32 = arith.constant 0 : i32
    %c0_i32_0 = arith.constant 0 : i32
    %c0_i32_1 = arith.constant 0 : i32
    return %arg0, %arg1, %c0_i32, %c0_i32_0 : i32, i32, i32, i32
  }
  func.func @transform_1(%arg0: i32, %arg1: i32) -> (i32, i32, i32, i32) {
    %c0_i32 = arith.constant 0 : i32
    %c0_i32_0 = arith.constant 0 : i32
    %c0_i32_1 = arith.constant 0 : i32
    return %arg0, %arg1, %c0_i32, %c0_i32_0 : i32, i32, i32, i32
  }
  func.func @transform_2(%arg0: i32, %arg1: i32) -> (i32, i32) {
    %c0_i32 = arith.constant 0 : i32
    %c0_i32_0 = arith.constant 0 : i32
    %c0_i32_1 = arith.constant 0 : i32
    return %c0_i32, %c0_i32_0 : i32, i32
  }
  func.func @transform_3(%arg0: i32, %arg1: i32) -> (i32, i32) {
    %c0_i32 = arith.constant 0 : i32
    %c0_i32_0 = arith.constant 0 : i32
    %c0_i32_1 = arith.constant 0 : i32
    return %c0_i32, %c0_i32_0 : i32, i32
  }
  func.func @transform_4(%arg0: i32, %arg1: i32) -> (i32, i32) {
    %c0_i32 = arith.constant 0 : i32
    %c0_i32_0 = arith.constant 0 : i32
    %c0_i32_1 = arith.constant 0 : i32
    return %c0_i32, %c0_i32_0 : i32, i32
  }
  func.func @transform_5(%arg0: i32, %arg1: i32) -> (i32, i32) {
    %c0_i32 = arith.constant 0 : i32
    %c0_i32_0 = arith.constant 0 : i32
    %c0_i32_1 = arith.constant 0 : i32
    return %c0_i32, %c0_i32_0 : i32, i32
  }
  func.func @transform_6(%arg0: i32, %arg1: i32) -> (i32, i32) {
    %c0_i32 = arith.constant 0 : i32
    %c0_i32_0 = arith.constant 0 : i32
    %c0_i32_1 = arith.constant 0 : i32
    return %c0_i32, %c0_i32_0 : i32, i32
  }
  func.func @transform_7(%arg0: i32, %arg1: i32) -> (i32, i32) {
    %c0_i32 = arith.constant 0 : i32
    %c0_i32_0 = arith.constant 0 : i32
    %c0_i32_1 = arith.constant 0 : i32
    return %c0_i32, %c0_i32_0 : i32, i32
  }
  func.func @transform_8(%arg0: i32, %arg1: i32) -> (i32, i32) {
    %c0_i32 = arith.constant 0 : i32
    %c0_i32_0 = arith.constant 0 : i32
    %c0_i32_1 = arith.constant 0 : i32
    return %c0_i32, %c0_i32_0 : i32, i32
  }
  func.func @transform_9(%arg0: i32, %arg1: i32) -> (i32, i32) {
    %c0_i32 = arith.constant 0 : i32
    %c0_i32_0 = arith.constant 0 : i32
    %c0_i32_1 = arith.constant 0 : i32
    return %c0_i32, %c0_i32_0 : i32, i32
  }
  func.func @transform_10(%arg0: i32, %arg1: i32) -> (i32, i32, i32, i32) {
    %c0_i32 = arith.constant 0 : i32
    %c0_i32_0 = arith.constant 0 : i32
    %c0_i32_1 = arith.constant 0 : i32
    return %arg0, %arg1, %c0_i32, %c0_i32_0 : i32, i32, i32, i32
  }
  func.func @transform_11(%arg0: i32, %arg1: i32) -> (i32, i32, i32, i32) {
    %c0_i32 = arith.constant 0 : i32
    %c0_i32_0 = arith.constant 0 : i32
    %c0_i32_1 = arith.constant 0 : i32
    return %arg0, %arg1, %c0_i32, %c0_i32_0 : i32, i32, i32, i32
  }
}

</mosaic_0001>

<llo_original>
// kernel: affine_coupling_forward.1
$region0: #{affine_coupling_forward.1}
  #allocation0 [shape = 'u32[]', space=smem, size = 0x4, offset = 0x4, fixed_abs, tag = 'smem constant byte address 0x4 - core index']
  #allocation1 [shape = 'u32[72,128]{1,0:T(1,128)}', space=vmem, size = 0x9000, scoped, tag = 'internal scratch']
  #allocation2 [shape = 'f32[10,18,36]{2,1,0:T(8,128)}', space=vmem, size = 0x1e000, scoped, tag = 'scratch operand']
  %s0 = inlined_call_operand.vmem [shape: f32[2,2,160,18], index: 0, kind: input, shape index: {}]
  %s1 = inlined_call_operand.vmem [shape: f32[2,16,16,2], index: 1, kind: input, shape index: {}]
  %s2 = inlined_call_operand.vmem [shape: f32[18,32], index: 2, kind: input, shape index: {}]
  %s3 = inlined_call_operand.vmem [shape: f32[1,32], index: 3, kind: input, shape index: {}]
  %s4 = inlined_call_operand.vmem [shape: f32[32,32], index: 4, kind: input, shape index: {}]
  %s5 = inlined_call_operand.vmem [shape: f32[1,32], index: 5, kind: input, shape index: {}]
  %s6 = inlined_call_operand.vmem [shape: f32[32,36], index: 6, kind: input, shape index: {}]
  %s7 = inlined_call_operand.vmem [shape: f32[1,4], index: 7, kind: input, shape index: {}]
  %s8 = inlined_call_operand.vmem [shape: f32[1,4], index: 8, kind: input, shape index: {}]
  %s9 = inlined_call_operand.vmem [shape: f32[1,36], index: 9, kind: input, shape index: {}]
  %s10 = inlined_call_operand.vmem [shape: f32[2,16,16,2], index: 10, kind: output, shape index: {0}]
  %s11 = inlined_call_operand.vmem [shape: f32[2,2,16,2], index: 11, kind: output, shape index: {1}]
  %12 = xla_tuple %s10, %s11
  %s13 = sld [smem:[#allocation0]]
  $region89: #{affine_coupling_forward.1} parent=0
    _
  %s15 = ssub.s32 1, %s13
  %s16 = scalar_select 0, %s15, %s13
  loop: start=0, step=1, limit=6
  $region2: #{affine_coupling_forward.1} parent=0 // loop_pre_header
    _
  $region3: #{affine_coupling_forward.1} parent=0 // loop_header
    %s18 = sphi 0, %s22
    %p19 = scmp.ge.s32.totalorder %s18, 6
    %s25 = sphi 0, %s37
    %s26 = sphi 0, %s33
    %s27 = sphi 0, %s25
    %s28 = sphi 0, %s26
    %s29 = sphi 0, %s27
    %s30 = sphi 0, %s28
    %s42 = sphi 0, %s44
    %s45 = sphi 0, %s42
    %s46 = sphi 0, %s45
    %s62 = sphi 0, %s46
    %s70 = sphi 0, %s72
    %s73 = sphi 0, %s70
    %s74 = sphi 0, %s73
    %s90 = sphi 0, %s74
    %s94 = sphi 0, %s94
    %s96 = sphi 0, %s94
    %s97 = sphi 0, %s96
    %s111 = sphi 0, %s97
    %s115 = sphi 0, %s115
    %s117 = sphi 0, %s115
    %s118 = sphi 0, %s117
    %s132 = sphi 0, %s118
    %s136 = sphi 0, %s136
    %s138 = sphi 0, %s136
    %s139 = sphi 0, %s138
    %s153 = sphi 0, %s139
    %s157 = sphi 0, %s157
    %s159 = sphi 0, %s157
    %s160 = sphi 0, %s159
    %s174 = sphi 0, %s160
    %s178 = sphi 0, %s178
    %s180 = sphi 0, %s178
    %s181 = sphi 0, %s180
    %s195 = sphi 0, %s181
    %s199 = sphi 0, %s199
    %s201 = sphi 0, %s199
    %s202 = sphi 0, %s201
    %s216 = sphi 0, %s202
    %s220 = sphi 0, %s220
    %s222 = sphi 0, %s220
    %s223 = sphi 0, %s222
    %s237 = sphi 0, %s223
    %s241 = sphi 0, %s241
    %s243 = sphi 0, %s241
    %s244 = sphi 0, %s243
    %s258 = sphi 0, %s244
    %s266 = sphi 0, %s268
    %s269 = sphi 0, %s266
    %s270 = sphi 0, %s269
    %s286 = sphi 0, %s270
    %s294 = sphi 0, %s296
    %s297 = sphi 0, %s294
    %s298 = sphi 0, %s297
    %s314 = sphi 0, %s298
  $region4: #{affine_coupling_forward.1} parent=0 // loop_header_branch
    %21 = sbr.rel (%p19) target = $region8
  $region5: #{affine_coupling_forward.1} parent=0 // loop_body
    %s23 = ssub.s32 %s18, 1
    %s24 = ssub.s32 %s18, 2
    %s31 = sadd.s32 1, %s26
    %p32 = scmp.ge.s32.totalorder %s31, 2
    %s33 = scalar_select %p32, 0, %s31
    %s34 = sadd.s32 1, %s25
    %s35 = scalar_select %p32, %s34, %s25
    %p36 = scmp.ge.s32.totalorder %s35, 2
    %s37 = scalar_select %p36, 0, %s35
    %s38 = ssub.s32 %s25, %s37
    %s39 = ssub.s32 %s26, %s33
    %s40 = sor.u32 %s38, %s39
    %p41 = scmp.eq.s32.totalorder %s40, 0
    %s43 = sadd.s32 %s42, 1
    %s44 = scalar_select %p41, %s42, %s43
    %p47 = pneg %p41
    %p48 = scmp.eq.s32.totalorder %s18, 3
    %p49 = por %p47, %p48
    %p50 = scmp.ne.s32.totalorder %s42, %s45
    %p51 = scmp.eq.s32.totalorder %s18, 0
    %p52 = por %p50, %p51
    %p53 = scmp.ne.s32.totalorder %s42, %s45
    %p54 = scmp.eq.s32.totalorder %s23, 3
    %p55 = por %p53, %p54
    %p56 = scmp.ne.s32.totalorder %s45, %s46
    %p57 = scmp.eq.s32.totalorder %s23, 0
    %p58 = por %p56, %p57
    %p59 = scmp.ne.s32.totalorder %s45, %s46
    %p60 = scmp.eq.s32.totalorder %s24, 3
    %p61 = por %p59, %p60
    %p63 = scmp.ne.s32.totalorder %s46, %s62
    %p64 = scmp.eq.s32.totalorder %s24, 0
    %p65 = por %p63, %p64
    %s66 = ssub.s32 %s25, %s37
    %s67 = ssub.s32 %s26, %s33
    %s68 = sor.u32 %s66, %s67
    %p69 = scmp.eq.s32.totalorder %s68, 0
    %s71 = sadd.s32 %s70, 1
    %s72 = scalar_select %p69, %s70, %s71
    %p75 = pneg %p69
    %p76 = scmp.eq.s32.totalorder %s18, 3
    %p77 = por %p75, %p76
    %p78 = scmp.ne.s32.totalorder %s70, %s73
    %p79 = scmp.eq.s32.totalorder %s18, 0
    %p80 = por %p78, %p79
    %p81 = scmp.ne.s32.totalorder %s70, %s73
    %p82 = scmp.eq.s32.totalorder %s23, 3
    %p83 = por %p81, %p82
    %p84 = scmp.ne.s32.totalorder %s73, %s74
    %p85 = scmp.eq.s32.totalorder %s23, 0
    %p86 = por %p84, %p85
    %p87 = scmp.ne.s32.totalorder %s73, %s74
    %p88 = scmp.eq.s32.totalorder %s24, 3
    %p89 = por %p87, %p88
    %p91 = scmp.ne.s32.totalorder %s74, %s90
    %p92 = scmp.eq.s32.totalorder %s24, 0
    %p93 = por %p91, %p92
    %s95 = sadd.s32 %s94, 1
    %p98 = scmp.eq.s32.totalorder %s18, 3
    %p99 = scmp.ne.s32.totalorder %s94, %s96
    %p100 = scmp.eq.s32.totalorder %s18, 0
    %p101 = por %p99, %p100
    %p102 = scmp.ne.s32.totalorder %s94, %s96
    %p103 = scmp.eq.s32.totalorder %s23, 3
    %p104 = por %p102, %p103
    %p105 = scmp.ne.s32.totalorder %s96, %s97
    %p106 = scmp.eq.s32.totalorder %s23, 0
    %p107 = por %p105, %p106
    %p108 = scmp.ne.s32.totalorder %s96, %s97
    %p109 = scmp.eq.s32.totalorder %s24, 3
    %p110 = por %p108, %p109
    %p112 = scmp.ne.s32.totalorder %s97, %s111
    %p113 = scmp.eq.s32.totalorder %s24, 0
    %p114 = por %p112, %p113
    %s116 = sadd.s32 %s115, 1
    %p119 = scmp.eq.s32.totalorder %s18, 3
    %p120 = scmp.ne.s32.totalorder %s115, %s117
    %p121 = scmp.eq.s32.totalorder %s18, 0
    %p122 = por %p120, %p121
    %p123 = scmp.ne.s32.totalorder %s115, %s117
    %p124 = scmp.eq.s32.totalorder %s23, 3
    %p125 = por %p123, %p124
    %p126 = scmp.ne.s32.totalorder %s117, %s118
    %p127 = scmp.eq.s32.totalorder %s23, 0
    %p128 = por %p126, %p127
    %p129 = scmp.ne.s32.totalorder %s117, %s118
    %p130 = scmp.eq.s32.totalorder %s24, 3
    %p131 = por %p129, %p130
    %p133 = scmp.ne.s32.totalorder %s118, %s132
    %p134 = scmp.eq.s32.totalorder %s24, 0
    %p135 = por %p133, %p134
    %s137 = sadd.s32 %s136, 1
    %p140 = scmp.eq.s32.totalorder %s18, 3
    %p141 = scmp.ne.s32.totalorder %s136, %s138
    %p142 = scmp.eq.s32.totalorder %s18, 0
    %p143 = por %p141, %p142
    %p144 = scmp.ne.s32.totalorder %s136, %s138
    %p145 = scmp.eq.s32.totalorder %s23, 3
    %p146 = por %p144, %p145
    %p147 = scmp.ne.s32.totalorder %s138, %s139
    %p148 = scmp.eq.s32.totalorder %s23, 0
    %p149 = por %p147, %p148
    %p150 = scmp.ne.s32.totalorder %s138, %s139
    %p151 = scmp.eq.s32.totalorder %s24, 3
    %p152 = por %p150, %p151
    %p154 = scmp.ne.s32.totalorder %s139, %s153
    %p155 = scmp.eq.s32.totalorder %s24, 0
    %p156 = por %p154, %p155
    %s158 = sadd.s32 %s157, 1
    %p161 = scmp.eq.s32.totalorder %s18, 3
    %p162 = scmp.ne.s32.totalorder %s157, %s159
    %p163 = scmp.eq.s32.totalorder %s18, 0
    %p164 = por %p162, %p163
    %p165 = scmp.ne.s32.totalorder %s157, %s159
    %p166 = scmp.eq.s32.totalorder %s23, 3
    %p167 = por %p165, %p166
    %p168 = scmp.ne.s32.totalorder %s159, %s160
    %p169 = scmp.eq.s32.totalorder %s23, 0
    %p170 = por %p168, %p169
    %p171 = scmp.ne.s32.totalorder %s159, %s160
    %p172 = scmp.eq.s32.totalorder %s24, 3
    %p173 = por %p171, %p172
    %p175 = scmp.ne.s32.totalorder %s160, %s174
    %p176 = scmp.eq.s32.totalorder %s24, 0
    %p177 = por %p175, %p176
    %s179 = sadd.s32 %s178, 1
    %p182 = scmp.eq.s32.totalorder %s18, 3
    %p183 = scmp.ne.s32.totalorder %s178, %s180
    %p184 = scmp.eq.s32.totalorder %s18, 0
    %p185 = por %p183, %p184
    %p186 = scmp.ne.s32.totalorder %s178, %s180
    %p187 = scmp.eq.s32.totalorder %s23, 3
    %p188 = por %p186, %p187
    %p189 = scmp.ne.s32.totalorder %s180, %s181
    %p190 = scmp.eq.s32.totalorder %s23, 0
    %p191 = por %p189, %p190
    %p192 = scmp.ne.s32.totalorder %s180, %s181
    %p193 = scmp.eq.s32.totalorder %s24, 3
    %p194 = por %p192, %p193
    %p196 = scmp.ne.s32.totalorder %s181, %s195
    %p197 = scmp.eq.s32.totalorder %s24, 0
    %p198 = por %p196, %p197
    %s200 = sadd.s32 %s199, 1
    %p203 = scmp.eq.s32.totalorder %s18, 3
    %p204 = scmp.ne.s32.totalorder %s199, %s201
    %p205 = scmp.eq.s32.totalorder %s18, 0
    %p206 = por %p204, %p205
    %p207 = scmp.ne.s32.totalorder %s199, %s201
    %p208 = scmp.eq.s32.totalorder %s23, 3
    %p209 = por %p207, %p208
    %p210 = scmp.ne.s32.totalorder %s201, %s202
    %p211 = scmp.eq.s32.totalorder %s23, 0
    %p212 = por %p210, %p211
    %p213 = scmp.ne.s32.totalorder %s201, %s202
    %p214 = scmp.eq.s32.totalorder %s24, 3
    %p215 = por %p213, %p214
    %p217 = scmp.ne.s32.totalorder %s202, %s216
    %p218 = scmp.eq.s32.totalorder %s24, 0
    %p219 = por %p217, %p218
    %s221 = sadd.s32 %s220, 1
    %p224 = scmp.eq.s32.totalorder %s18, 3
    %p225 = scmp.ne.s32.totalorder %s220, %s222
    %p226 = scmp.eq.s32.totalorder %s18, 0
    %p227 = por %p225, %p226
    %p228 = scmp.ne.s32.totalorder %s220, %s222
    %p229 = scmp.eq.s32.totalorder %s23, 3
    %p230 = por %p228, %p229
    %p231 = scmp.ne.s32.totalorder %s222, %s223
    %p232 = scmp.eq.s32.totalorder %s23, 0
    %p233 = por %p231, %p232
    %p234 = scmp.ne.s32.totalorder %s222, %s223
    %p235 = scmp.eq.s32.totalorder %s24, 3
    %p236 = por %p234, %p235
    %p238 = scmp.ne.s32.totalorder %s223, %s237
    %p239 = scmp.eq.s32.totalorder %s24, 0
    %p240 = por %p238, %p239
    %s242 = sadd.s32 %s241, 1
    %p245 = scmp.eq.s32.totalorder %s18, 3
    %p246 = scmp.ne.s32.totalorder %s241, %s243
    %p247 = scmp.eq.s32.totalorder %s18, 0
    %p248 = por %p246, %p247
    %p249 = scmp.ne.s32.totalorder %s241, %s243
    %p250 = scmp.eq.s32.totalorder %s23, 3
    %p251 = por %p249, %p250
    %p252 = scmp.ne.s32.totalorder %s243, %s244
    %p253 = scmp.eq.s32.totalorder %s23, 0
    %p254 = por %p252, %p253
    %p255 = scmp.ne.s32.totalorder %s243, %s244
    %p256 = scmp.eq.s32.totalorder %s24, 3
    %p257 = por %p255, %p256
    %p259 = scmp.ne.s32.totalorder %s244, %s258
    %p260 = scmp.eq.s32.totalorder %s24, 0
    %p261 = por %p259, %p260
    %s262 = ssub.s32 %s25, %s37
    %s263 = ssub.s32 %s26, %s33
    %s264 = sor.u32 %s262, %s263
    %p265 = scmp.eq.s32.totalorder %s264, 0
    %s267 = sadd.s32 %s266, 1
    %s268 = scalar_select %p265, %s266, %s267
    %p271 = pneg %p265
    %p272 = scmp.eq.s32.totalorder %s18, 3
    %p273 = por %p271, %p272
    %p274 = scmp.ne.s32.totalorder %s266, %s269
    %p275 = scmp.eq.s32.totalorder %s18, 0
    %p276 = por %p274, %p275
    %p277 = scmp.ne.s32.totalorder %s266, %s269
    %p278 = scmp.eq.s32.totalorder %s23, 3
    %p279 = por %p277, %p278
    %p280 = scmp.ne.s32.totalorder %s269, %s270
    %p281 = scmp.eq.s32.totalorder %s23, 0
    %p282 = por %p280, %p281
    %p283 = scmp.ne.s32.totalorder %s269, %s270
    %p284 = scmp.eq.s32.totalorder %s24, 3
    %p285 = por %p283, %p284
    %p287 = scmp.ne.s32.totalorder %s270, %s286
    %p288 = scmp.eq.s32.totalorder %s24, 0
    %p289 = por %p287, %p288
    %s290 = ssub.s32 %s25, %s37
    %s291 = ssub.s32 %s26, %s33
    %s292 = sor.u32 %s290, %s291
    %p293 = scmp.eq.s32.totalorder %s292, 0
    %s295 = sadd.s32 %s294, 1
    %s296 = scalar_select %p293, %s294, %s295
    %p299 = pneg %p293
    %p300 = scmp.eq.s32.totalorder %s18, 3
    %p301 = por %p299, %p300
    %p302 = scmp.ne.s32.totalorder %s294, %s297
    %p303 = scmp.eq.s32.totalorder %s18, 0
    %p304 = por %p302, %p303
    %p305 = scmp.ne.s32.totalorder %s294, %s297
    %p306 = scmp.eq.s32.totalorder %s23, 3
    %p307 = por %p305, %p306
    %p308 = scmp.ne.s32.totalorder %s297, %s298
    %p309 = scmp.eq.s32.totalorder %s23, 0
    %p310 = por %p308, %p309
    %p311 = scmp.ne.s32.totalorder %s297, %s298
    %p312 = scmp.eq.s32.totalorder %s24, 3
    %p313 = por %p311, %p312
    %p315 = scmp.ne.s32.totalorder %s298, %s314
    %p316 = scmp.eq.s32.totalorder %s24, 0
    %p317 = por %p315, %p316
    %p318 = scmp.le.s32.totalorder 1, %s18
    %p319 = scmp.lt.s32.totalorder %s18, 5
    %p320 = pnand %p318, %p319
    %p321 = pneg %p320
    // Predicated region
    $region9: #{affine_coupling_forward.1} parent=5 // pred_check
      _
    $region10: #{affine_coupling_forward.1} parent=5 // pred_check_branch
      %323 = sbr.rel (%p320) target = $region12
    $region11: #{affine_coupling_forward.1} parent=5 // pred_region
      %s324 = ssub.s32 %s18, 1
      // Predicated region
      $region13: #{affine_coupling_forward.1} parent=11 // pred_check
        %p325 = pneg %p107
      $region14: #{affine_coupling_forward.1} parent=11 // pred_check_branch
        %327 = sbr.rel (%p325) target = $region16
      $region15: #{affine_coupling_forward.1} parent=11 // pred_region
        _
      $region16: #{affine_coupling_forward.1} parent=11 // pred_fallthru
        _
      // Predicated region
      $region17: #{affine_coupling_forward.1} parent=11 // pred_check
        %p328 = pneg %p128
      $region18: #{affine_coupling_forward.1} parent=11 // pred_check_branch
        %330 = sbr.rel (%p328) target = $region20
      $region19: #{affine_coupling_forward.1} parent=11 // pred_region
        _
      $region20: #{affine_coupling_forward.1} parent=11 // pred_fallthru
        _
      // Predicated region
      $region21: #{affine_coupling_forward.1} parent=11 // pred_check
        %p331 = pneg %p149
      $region22: #{affine_coupling_forward.1} parent=11 // pred_check_branch
        %333 = sbr.rel (%p331) target = $region24
      $region23: #{affine_coupling_forward.1} parent=11 // pred_region
        _
      $region24: #{affine_coupling_forward.1} parent=11 // pred_fallthru
        _
      // Predicated region
      $region25: #{affine_coupling_forward.1} parent=11 // pred_check
        %p334 = pneg %p170
      $region26: #{affine_coupling_forward.1} parent=11 // pred_check_branch
        %336 = sbr.rel (%p334) target = $region28
      $region27: #{affine_coupling_forward.1} parent=11 // pred_region
        _
      $region28: #{affine_coupling_forward.1} parent=11 // pred_fallthru
        _
      // Predicated region
      $region29: #{affine_coupling_forward.1} parent=11 // pred_check
        %p337 = pneg %p191
      $region30: #{affine_coupling_forward.1} parent=11 // pred_check_branch
        %339 = sbr.rel (%p337) target = $region32
      $region31: #{affine_coupling_forward.1} parent=11 // pred_region
        _
      $region32: #{affine_coupling_forward.1} parent=11 // pred_fallthru
        _
      // Predicated region
      $region33: #{affine_coupling_forward.1} parent=11 // pred_check
        %p340 = pneg %p212
      $region34: #{affine_coupling_forward.1} parent=11 // pred_check_branch
        %342 = sbr.rel (%p340) target = $region36
      $region35: #{affine_coupling_forward.1} parent=11 // pred_region
        _
      $region36: #{affine_coupling_forward.1} parent=11 // pred_fallthru
        _
      // Predicated region
      $region37: #{affine_coupling_forward.1} parent=11 // pred_check
        %p343 = pneg %p233
      $region38: #{affine_coupling_forward.1} parent=11 // pred_check_branch
        %345 = sbr.rel (%p343) target = $region40
      $region39: #{affine_coupling_forward.1} parent=11 // pred_region
        _
      $region40: #{affine_coupling_forward.1} parent=11 // pred_fallthru
        _
      // Predicated region
      $region41: #{affine_coupling_forward.1} parent=11 // pred_check
        %p346 = pneg %p254
      $region42: #{affine_coupling_forward.1} parent=11 // pred_check_branch
        %348 = sbr.rel (%p346) target = $region44
      $region43: #{affine_coupling_forward.1} parent=11 // pred_region
        _
      $region44: #{affine_coupling_forward.1} parent=11 // pred_fallthru
        _
    $region12: #{affine_coupling_forward.1} parent=5 // pred_fallthru
      _
    %p349 = scmp.lt.s32.totalorder %s18, 4
    // Predicated region
    $region45: #{affine_coupling_forward.1} parent=5 // pred_check
      %p350 = pneg %p349
    $region46: #{affine_coupling_forward.1} parent=5 // pred_check_branch
      %352 = sbr.rel (%p350) target = $region48
    $region47: #{affine_coupling_forward.1} parent=5 // pred_region
      // Predicated region
      $region49: #{affine_coupling_forward.1} parent=47 // pred_check
        %p353 = pneg %p52
      $region50: #{affine_coupling_forward.1} parent=47 // pred_check_branch
        %355 = sbr.rel (%p353) target = $region52
      $region51: #{affine_coupling_forward.1} parent=47 // pred_region
        %p356 = scmp.lt.s32.totalorder %s25, 1
        %s357 = scalar_select %p356, %s25, 1
        %p358 = scmp.lt.s32.totalorder %s26, 1
        %s359 = scalar_select %p358, %s26, 1
        %s360 = smul.addr %s359, 20
        %s361 = smul.addr %s357, 40
        %s362 = sadd.s32 %s360, %s361
        %s363 = smul.addr %s362, 8
        %s364 = scalar_lea.vmem %s0, %s363
      $region52: #{affine_coupling_forward.1} parent=47 // pred_fallthru
        _
      // Predicated region
      $region53: #{affine_coupling_forward.1} parent=47 // pred_check
        %p365 = pneg %p80
      $region54: #{affine_coupling_forward.1} parent=47 // pred_check_branch
        %367 = sbr.rel (%p365) target = $region56
      $region55: #{affine_coupling_forward.1} parent=47 // pred_region
        %s368 = smul.u32 8, %s26
        %p369 = scmp.lt.s32.totalorder %s25, 1
        %s370 = scalar_select %p369, %s25, 1
        %p371 = scmp.lt.s32.totalorder %s368, 15
        %s372 = scalar_select %p371, %s368, 15
        %s373 = smul.addr %s372, 2
        %s374 = smul.addr %s370, 32
        %s375 = sadd.s32 %s373, %s374
        %s376 = smul.addr %s375, 8
        %s377 = scalar_lea.vmem %s1, %s376
        %s378 = smul.u32 8, %s26
      $region56: #{affine_coupling_forward.1} parent=47 // pred_fallthru
        _
    $region48: #{affine_coupling_forward.1} parent=5 // pred_fallthru
      _
    %p379 = scmp.le.s32.totalorder 1, %s18
    %p380 = scmp.lt.s32.totalorder %s18, 5
    %p381 = pnand %p379, %p380
    %p382 = pneg %p381
    // Predicated region
    $region57: #{affine_coupling_forward.1} parent=5 // pred_check
      _
    $region58: #{affine_coupling_forward.1} parent=5 // pred_check_branch
      %384 = sbr.rel (%p381) target = $region60
    $region59: #{affine_coupling_forward.1} parent=5 // pred_region
      %s385 = ssub.s32 %s18, 1
      %p386 = scmp.lt.s32.totalorder %s27, 1
      %s387 = scalar_select %p386, %s27, 1
      %p388 = scmp.lt.s32.totalorder %s28, 1
      %s389 = scalar_select %p388, %s28, 1
      %s390 = smul.addr %s389, 20
      %s391 = smul.addr %s387, 40
      %s392 = sadd.s32 %s390, %s391
      %s393 = smul.addr %s392, 8
      %s394 = scalar_lea.vmem %s0, %s393
      %p395 = pneg %p58
      %p396 = pneg %p55
      %s397 = smul.u32 8, %s28
      %p398 = scmp.lt.s32.totalorder %s27, 1
      %s399 = scalar_select %p398, %s27, 1
      %p400 = scmp.lt.s32.totalorder %s397, 15
      %s401 = scalar_select %p400, %s397, 15
      %s402 = smul.addr %s401, 2
      %s403 = smul.addr %s399, 32
      %s404 = sadd.s32 %s402, %s403
      %s405 = smul.addr %s404, 8
      %s406 = scalar_lea.vmem %s1, %s405
      %p407 = pneg %p86
      %p408 = pneg %p83
      %p409 = pneg %p107
      %p410 = pneg %p104
      %p411 = pneg %p128
      %p412 = pneg %p125
      %p413 = pneg %p149
      %p414 = pneg %p146
      %p415 = pneg %p170
      %p416 = pneg %p167
      %p417 = pneg %p191
      %p418 = pneg %p188
      %p419 = pneg %p212
      %p420 = pneg %p209
      %p421 = pneg %p233
      %p422 = pneg %p230
      %p423 = pneg %p254
      %p424 = pneg %p251
      %p425 = pneg %p282
      %p426 = pneg %p279
      %s427 = smul.u32 8, %s28
      %p428 = scmp.lt.s32.totalorder %s27, 1
      %s429 = scalar_select %p428, %s27, 1
      %p430 = scmp.lt.s32.totalorder %s427, 15
      %s431 = scalar_select %p430, %s427, 15
      %s432 = smul.addr %s431, 2
      %s433 = smul.addr %s429, 32
      %s434 = sadd.s32 %s432, %s433
      %s435 = smul.addr %s434, 8
      %s436 = scalar_lea.vmem %s10, %s435
      %p437 = pneg %p310
      %p438 = pneg %p307
      %p439 = scmp.lt.s32.totalorder %s27, 1
      %s440 = scalar_select %p439, %s27, 1
      %p441 = scmp.lt.s32.totalorder %s28, 1
      %s442 = scalar_select %p441, %s28, 1
      %s443 = smul.addr %s442, 2
      %s444 = smul.addr %s440, 4
      %s445 = sadd.s32 %s443, %s444
      %s446 = smul.addr %s445, 8
      %s447 = scalar_lea.vmem %s11, %s446
      %p448 = scmp.lt.s32.totalorder %s27, 1
      %s449 = scalar_select %p448, %s27, 1
      %p450 = scmp.lt.s32.totalorder %s28, 1
      %s451 = scalar_select %p450, %s28, 1
      %s452 = smul.addr %s451, 20
      %s453 = smul.addr %s449, 40
      %s454 = sadd.s32 %s452, %s453
      %s455 = smul.addr %s454, 8
      %s456 = scalar_lea.vmem %s0, %s455
      %s457 = smul.u32 8, %s28
      %p458 = scmp.lt.s32.totalorder %s27, 1
      %s459 = scalar_select %p458, %s27, 1
      %p460 = scmp.lt.s32.totalorder %s457, 15
      %s461 = scalar_select %p460, %s457, 15
      %s462 = smul.addr %s461, 2
      %s463 = smul.addr %s459, 32
      %s464 = sadd.s32 %s462, %s463
      %s465 = smul.addr %s464, 8
      %s466 = scalar_lea.vmem %s1, %s465
      %s467 = smul.u32 8, %s28
      %s468 = smul.u32 8, %s28
      %p469 = scmp.lt.s32.totalorder %s27, 1
      %s470 = scalar_select %p469, %s27, 1
      %p471 = scmp.lt.s32.totalorder %s468, 15
      %s472 = scalar_select %p471, %s468, 15
      %s473 = smul.addr %s472, 2
      %s474 = smul.addr %s470, 32
      %s475 = sadd.s32 %s473, %s474
      %s476 = smul.addr %s475, 8
      %s477 = scalar_lea.vmem %s10, %s476
      %s478 = smul.u32 8, %s28
      %p479 = scmp.lt.s32.totalorder %s27, 1
      %s480 = scalar_select %p479, %s27, 1
      %p481 = scmp.lt.s32.totalorder %s28, 1
      %s482 = scalar_select %p481, %s28, 1
      %s483 = smul.addr %s482, 2
      %s484 = smul.addr %s480, 4
      %s485 = sadd.s32 %s483, %s484
      %s486 = smul.addr %s485, 8
      %s487 = scalar_lea.vmem %s11, %s486
      %v488 = vld [vmem:[%s456] sm:$0xff]
      %v489 = vld [vmem:[%s456 + $0x8] sm:$0xff]
      %v490 = vld [vmem:[%s456 + $0x10] sm:$0xff]
      %v491 = vld [vmem:[%s456 + $0x18] sm:$0xff]
      %v492 = vld [vmem:[%s456 + $0x20] sm:$0xff]
      %v493 = vld [vmem:[%s456 + $0x28] sm:$0xff]
      %v494 = vld [vmem:[%s456 + $0x30] sm:$0xff]
      %v495 = vld [vmem:[%s456 + $0x38] sm:$0xff]
      %v496 = vld [vmem:[%s456 + $0x40] sm:$0xff]
      %v497 = vld [vmem:[%s456 + $0x48] sm:$0xff]
      %v498 = vld [vmem:[%s456 + $0x50] sm:$0xff]
      %v499 = vld [vmem:[%s456 + $0x58] sm:$0xff]
      %v500 = vld [vmem:[%s456 + $0x60] sm:$0xff]
      %v501 = vld [vmem:[%s456 + $0x68] sm:$0xff]
      %v502 = vld [vmem:[%s456 + $0x70] sm:$0xff]
      %v503 = vld [vmem:[%s456 + $0x78] sm:$0xff]
      %v504 = vld [vmem:[%s456 + $0x80] sm:$0xff]
      %v505 = vld [vmem:[%s456 + $0x88] sm:$0xff]
      %v506 = vld [vmem:[%s456 + $0x90] sm:$0xff]
      %v507 = vld [vmem:[%s456 + $0x98] sm:$0xff]
      %v508 = vld [vmem:[%s2] sm:$0xff]
      %v509 = vld [vmem:[%s2 + $0x8] sm:$0xff]
      %v510 = vld [vmem:[%s2 + $0x10] sm:$0x3]
      %v511 = vld [vmem:[%s3] sm:$0x1]
      %v513 = vperm.slane %v511, 0
      %vm515 = vcmask 146432
      %v517 = vsel %vm515, %v488, 0
      %v520 = vsel %vm515, %v489, 0
      %v523 = vsel %vm515, %v490, 0
      %v526 = vsel %vm515, %v491, 0
      %v529 = vsel %vm515, %v492, 0
      %v532 = vsel %vm515, %v493, 0
      %v535 = vsel %vm515, %v494, 0
      %v538 = vsel %vm515, %v495, 0
      %v541 = vsel %vm515, %v496, 0
      %v544 = vsel %vm515, %v497, 0
      %v547 = vsel %vm515, %v498, 0
      %v550 = vsel %vm515, %v499, 0
      %v553 = vsel %vm515, %v500, 0
      %v556 = vsel %vm515, %v501, 0
      %v559 = vsel %vm515, %v502, 0
      %v562 = vsel %vm515, %v503, 0
      %v565 = vsel %vm515, %v504, 0
      %v568 = vsel %vm515, %v505, 0
      %v571 = vsel %vm515, %v506, 0
      %v574 = vsel %vm515, %v507, 0
      %vm576 = vcmask 1041408
      %v578 = vsel %vm576, %v510, 0
      %580 = vmatpush.msra.mxu0 0.0
      %581 = vmatpush.msra.mxu0 0.0
      %582 = vmatpush.msra.mxu0 0.0
      %583 = vmatpush.msra.mxu0 0.0
      %584 = vmatpush.msra.mxu0 0.0
      %585 = vmatpush.msra.mxu0 0.0
      %586 = vmatpush.msra.mxu0 0.0
      %587 = vmatpush.msra.mxu0 0.0
      %588 = vmatpush.msra.mxu0 0.0
      %589 = vmatpush.msra.mxu0 0.0
      %590 = vmatpush.msra.mxu0 0.0
      %591 = vmatpush.msra.mxu0 0.0
      %592 = vmatpush.msra.mxu0 0.0
      %593 = vmatpush.msra.mxu0 %v578
      %594 = vmatpush.msra.mxu0 %v509
      %595 = vmatpush.msra.mxu0 %v508
      %596 = vmatmul.f32.gmra.mxu0 %v517
      %v597 = vpop.f32.mrf.mxu0
      %v598 = vadd.f32 %v513, %v597
      %599 = vmatmul.f32.gmra.mxu0 %v520
      %v600 = vpop.f32.mrf.mxu0
      %v601 = vadd.f32 %v513, %v600
      %602 = vmatmul.f32.gmra.mxu0 %v523
      %v603 = vpop.f32.mrf.mxu0
      %v604 = vadd.f32 %v513, %v603
      %605 = vmatmul.f32.gmra.mxu0 %v526
      %v606 = vpop.f32.mrf.mxu0
      %v607 = vadd.f32 %v513, %v606
      %608 = vmatmul.f32.gmra.mxu0 %v529
      %v609 = vpop.f32.mrf.mxu0
      %v610 = vadd.f32 %v513, %v609
      %611 = vmatmul.f32.gmra.mxu0 %v532
      %v612 = vpop.f32.mrf.mxu0
      %v613 = vadd.f32 %v513, %v612
      %614 = vmatmul.f32.gmra.mxu0 %v535
      %v615 = vpop.f32.mrf.mxu0
      %v616 = vadd.f32 %v513, %v615
      %617 = vmatmul.f32.gmra.mxu0 %v538
      %v618 = vpop.f32.mrf.mxu0
      %v619 = vadd.f32 %v513, %v618
      %620 = vmatmul.f32.gmra.mxu0 %v541
      %v621 = vpop.f32.mrf.mxu0
      %v622 = vadd.f32 %v513, %v621
      %623 = vmatmul.f32.gmra.mxu0 %v544
      %v624 = vpop.f32.mrf.mxu0
      %v625 = vadd.f32 %v513, %v624
      %626 = vmatmul.f32.gmra.mxu0 %v547
      %v627 = vpop.f32.mrf.mxu0
      %v628 = vadd.f32 %v513, %v627
      %629 = vmatmul.f32.gmra.mxu0 %v550
      %v630 = vpop.f32.mrf.mxu0
      %v631 = vadd.f32 %v513, %v630
      %632 = vmatmul.f32.gmra.mxu0 %v553
      %v633 = vpop.f32.mrf.mxu0
      %v634 = vadd.f32 %v513, %v633
      %635 = vmatmul.f32.gmra.mxu0 %v556
      %v636 = vpop.f32.mrf.mxu0
      %v637 = vadd.f32 %v513, %v636
      %638 = vmatmul.f32.gmra.mxu0 %v559
      %v639 = vpop.f32.mrf.mxu0
      %v640 = vadd.f32 %v513, %v639
      %641 = vmatmul.f32.gmra.mxu0 %v562
      %v642 = vpop.f32.mrf.mxu0
      %v643 = vadd.f32 %v513, %v642
      %644 = vmatmul.f32.gmra.mxu0 %v565
      %v645 = vpop.f32.mrf.mxu0
      %v646 = vadd.f32 %v513, %v645
      %647 = vmatmul.f32.gmra.mxu0 %v568
      %v648 = vpop.f32.mrf.mxu0
      %v649 = vadd.f32 %v513, %v648
      %650 = vmatmul.f32.gmra.mxu0 %v571
      %v651 = vpop.f32.mrf.mxu0
      %v652 = vadd.f32 %v513, %v651
      %653 = vmatmul.f32.gmra.mxu0 %v574
      %v654 = vpop.f32.mrf.mxu0
      %v655 = vadd.f32 %v513, %v654
      %656 = vdwg.mxu0
      %v657 = vmax.f32 %v598, 0.0
      %v658 = vmax.f32 %v601, 0.0
      %v659 = vmax.f32 %v604, 0.0
      %v660 = vmax.f32 %v607, 0.0
      %v661 = vmax.f32 %v610, 0.0
      %v662 = vmax.f32 %v613, 0.0
      %v663 = vmax.f32 %v616, 0.0
      %v664 = vmax.f32 %v619, 0.0
      %v665 = vmax.f32 %v622, 0.0
      %v666 = vmax.f32 %v625, 0.0
      %v667 = vmax.f32 %v628, 0.0
      %v668 = vmax.f32 %v631, 0.0
      %v669 = vmax.f32 %v634, 0.0
      %v670 = vmax.f32 %v637, 0.0
      %v671 = vmax.f32 %v640, 0.0
      %v672 = vmax.f32 %v643, 0.0
      %v673 = vmax.f32 %v646, 0.0
      %v674 = vmax.f32 %v649, 0.0
      %v675 = vmax.f32 %v652, 0.0
      %v676 = vmax.f32 %v655, 0.0
      %v677 = vld [vmem:[%s4] sm:$0xff]
      %v678 = vld [vmem:[%s4 + $0x8] sm:$0xff]
      %v679 = vld [vmem:[%s4 + $0x10] sm:$0xff]
      %v680 = vld [vmem:[%s4 + $0x18] sm:$0xff]
      %v681 = vld [vmem:[%s5] sm:$0x1]
      %v683 = vperm.slane %v681, 0
      %vm685 = vcmask 261120
      %v687 = vsel %vm685, %v657, 0
      %v690 = vsel %vm685, %v658, 0
      %v693 = vsel %vm685, %v659, 0
      %v696 = vsel %vm685, %v660, 0
      %v699 = vsel %vm685, %v661, 0
      %v702 = vsel %vm685, %v662, 0
      %v705 = vsel %vm685, %v663, 0
      %v708 = vsel %vm685, %v664, 0
      %v711 = vsel %vm685, %v665, 0
      %v714 = vsel %vm685, %v666, 0
      %v717 = vsel %vm685, %v667, 0
      %v720 = vsel %vm685, %v668, 0
      %v723 = vsel %vm685, %v669, 0
      %v726 = vsel %vm685, %v670, 0
      %v729 = vsel %vm685, %v671, 0
      %v732 = vsel %vm685, %v672, 0
      %v735 = vsel %vm685, %v673, 0
      %v738 = vsel %vm685, %v674, 0
      %v741 = vsel %vm685, %v675, 0
      %v744 = vsel %vm685, %v676, 0
      %746 = vmatpush.msra.mxu0 0.0
      %747 = vmatpush.msra.mxu0 0.0
      %748 = vmatpush.msra.mxu0 0.0
      %749 = vmatpush.msra.mxu0 0.0
      %750 = vmatpush.msra.mxu0 0.0
      %751 = vmatpush.msra.mxu0 0.0
      %752 = vmatpush.msra.mxu0 0.0
      %753 = vmatpush.msra.mxu0 0.0
      %754 = vmatpush.msra.mxu0 0.0
      %755 = vmatpush.msra.mxu0 0.0
      %756 = vmatpush.msra.mxu0 0.0
      %757 = vmatpush.msra.mxu0 0.0
      %758 = vmatpush.msra.mxu0 %v680
      %759 = vmatpush.msra.mxu0 %v679
      %760 = vmatpush.msra.mxu0 %v678
      %761 = vmatpush.msra.mxu0 %v677
      %762 = vmatmul.f32.gmra.mxu0 %v687
      %v763 = vpop.f32.mrf.mxu0
      %v764 = vadd.f32 %v683, %v763
      %765 = vmatmul.f32.gmra.mxu0 %v690
      %v766 = vpop.f32.mrf.mxu0
      %v767 = vadd.f32 %v683, %v766
      %768 = vmatmul.f32.gmra.mxu0 %v693
      %v769 = vpop.f32.mrf.mxu0
      %v770 = vadd.f32 %v683, %v769
      %771 = vmatmul.f32.gmra.mxu0 %v696
      %v772 = vpop.f32.mrf.mxu0
      %v773 = vadd.f32 %v683, %v772
      %774 = vmatmul.f32.gmra.mxu0 %v699
      %v775 = vpop.f32.mrf.mxu0
      %v776 = vadd.f32 %v683, %v775
      %777 = vmatmul.f32.gmra.mxu0 %v702
      %v778 = vpop.f32.mrf.mxu0
      %v779 = vadd.f32 %v683, %v778
      %780 = vmatmul.f32.gmra.mxu0 %v705
      %v781 = vpop.f32.mrf.mxu0
      %v782 = vadd.f32 %v683, %v781
      %783 = vmatmul.f32.gmra.mxu0 %v708
      %v784 = vpop.f32.mrf.mxu0
      %v785 = vadd.f32 %v683, %v784
      %786 = vmatmul.f32.gmra.mxu0 %v711
      %v787 = vpop.f32.mrf.mxu0
      %v788 = vadd.f32 %v683, %v787
      %789 = vmatmul.f32.gmra.mxu0 %v714
      %v790 = vpop.f32.mrf.mxu0
      %v791 = vadd.f32 %v683, %v790
      %792 = vmatmul.f32.gmra.mxu0 %v717
      %v793 = vpop.f32.mrf.mxu0
      %v794 = vadd.f32 %v683, %v793
      %795 = vmatmul.f32.gmra.mxu0 %v720
      %v796 = vpop.f32.mrf.mxu0
      %v797 = vadd.f32 %v683, %v796
      %798 = vmatmul.f32.gmra.mxu0 %v723
      %v799 = vpop.f32.mrf.mxu0
      %v800 = vadd.f32 %v683, %v799
      %801 = vmatmul.f32.gmra.mxu0 %v726
      %v802 = vpop.f32.mrf.mxu0
      %v803 = vadd.f32 %v683, %v802
      %804 = vmatmul.f32.gmra.mxu0 %v729
      %v805 = vpop.f32.mrf.mxu0
      %v806 = vadd.f32 %v683, %v805
      %807 = vmatmul.f32.gmra.mxu0 %v732
      %v808 = vpop.f32.mrf.mxu0
      %v809 = vadd.f32 %v683, %v808
      %810 = vmatmul.f32.gmra.mxu0 %v735
      %v811 = vpop.f32.mrf.mxu0
      %v812 = vadd.f32 %v683, %v811
      %813 = vmatmul.f32.gmra.mxu0 %v738
      %v814 = vpop.f32.mrf.mxu0
      %v815 = vadd.f32 %v683, %v814
      %816 = vmatmul.f32.gmra.mxu0 %v741
      %v817 = vpop.f32.mrf.mxu0
      %v818 = vadd.f32 %v683, %v817
      %819 = vmatmul.f32.gmra.mxu0 %v744
      %v820 = vpop.f32.mrf.mxu0
      %v821 = vadd.f32 %v683, %v820
      %822 = vdwg.mxu0
      %v823 = vmax.f32 %v764, 0.0
      %v824 = vmax.f32 %v767, 0.0
      %v825 = vmax.f32 %v770, 0.0
      %v826 = vmax.f32 %v773, 0.0
      %v827 = vmax.f32 %v776, 0.0
      %v828 = vmax.f32 %v779, 0.0
      %v829 = vmax.f32 %v782, 0.0
      %v830 = vmax.f32 %v785, 0.0
      %v831 = vmax.f32 %v788, 0.0
      %v832 = vmax.f32 %v791, 0.0
      %v833 = vmax.f32 %v794, 0.0
      %v834 = vmax.f32 %v797, 0.0
      %v835 = vmax.f32 %v800, 0.0
      %v836 = vmax.f32 %v803, 0.0
      %v837 = vmax.f32 %v806, 0.0
      %v838 = vmax.f32 %v809, 0.0
      %v839 = vmax.f32 %v812, 0.0
      %v840 = vmax.f32 %v815, 0.0
      %v841 = vmax.f32 %v818, 0.0
      %v842 = vmax.f32 %v821, 0.0
      %v843 = vld [vmem:[%s6] sm:$0xff]
      %v844 = vld [vmem:[%s6 + $0x8] sm:$0xff]
      %v845 = vld [vmem:[%s6 + $0x10] sm:$0xff]
      %v846 = vld [vmem:[%s6 + $0x18] sm:$0xff]
      %v848 = vsel %vm685, %v823, 0
      %v851 = vsel %vm685, %v824, 0
      %v854 = vsel %vm685, %v825, 0
      %v857 = vsel %vm685, %v826, 0
      %v860 = vsel %vm685, %v827, 0
      %v863 = vsel %vm685, %v828, 0
      %v866 = vsel %vm685, %v829, 0
      %v869 = vsel %vm685, %v830, 0
      %v872 = vsel %vm685, %v831, 0
      %v875 = vsel %vm685, %v832, 0
      %v878 = vsel %vm685, %v833, 0
      %v881 = vsel %vm685, %v834, 0
      %v884 = vsel %vm685, %v835, 0
      %v887 = vsel %vm685, %v836, 0
      %v890 = vsel %vm685, %v837, 0
      %v893 = vsel %vm685, %v838, 0
      %v896 = vsel %vm685, %v839, 0
      %v899 = vsel %vm685, %v840, 0
      %v902 = vsel %vm685, %v841, 0
      %v905 = vsel %vm685, %v842, 0
      %907 = vmatpush.msra.mxu0 0.0
      %908 = vmatpush.msra.mxu0 0.0
      %909 = vmatpush.msra.mxu0 0.0
      %910 = vmatpush.msra.mxu0 0.0
      %911 = vmatpush.msra.mxu0 0.0
      %912 = vmatpush.msra.mxu0 0.0
      %913 = vmatpush.msra.mxu0 0.0
      %914 = vmatpush.msra.mxu0 0.0
      %915 = vmatpush.msra.mxu0 0.0
      %916 = vmatpush.msra.mxu0 0.0
      %917 = vmatpush.msra.mxu0 0.0
      %918 = vmatpush.msra.mxu0 0.0
      %919 = vmatpush.msra.mxu0 %v846
      %920 = vmatpush.msra.mxu0 %v845
      %921 = vmatpush.msra.mxu0 %v844
      %922 = vmatpush.msra.mxu0 %v843
      %923 = vmatmul.f32.gmra.mxu0 %v848
      %v924 = vpop.f32.mrf.mxu0
      %v925 = vadd.f32 0.0, %v924
      %926 = vmatmul.f32.gmra.mxu0 %v851
      %v927 = vpop.f32.mrf.mxu0
      %v928 = vadd.f32 0.0, %v927
      %929 = vmatmul.f32.gmra.mxu0 %v854
      %v930 = vpop.f32.mrf.mxu0
      %v931 = vadd.f32 0.0, %v930
      %932 = vmatmul.f32.gmra.mxu0 %v857
      %v933 = vpop.f32.mrf.mxu0
      %v934 = vadd.f32 0.0, %v933
      %935 = vmatmul.f32.gmra.mxu0 %v860
      %v936 = vpop.f32.mrf.mxu0
      %v937 = vadd.f32 0.0, %v936
      %938 = vmatmul.f32.gmra.mxu0 %v863
      %v939 = vpop.f32.mrf.mxu0
      %v940 = vadd.f32 0.0, %v939
      %941 = vmatmul.f32.gmra.mxu0 %v866
      %v942 = vpop.f32.mrf.mxu0
      %v943 = vadd.f32 0.0, %v942
      %944 = vmatmul.f32.gmra.mxu0 %v869
      %v945 = vpop.f32.mrf.mxu0
      %v946 = vadd.f32 0.0, %v945
      %947 = vmatmul.f32.gmra.mxu0 %v872
      %v948 = vpop.f32.mrf.mxu0
      %v949 = vadd.f32 0.0, %v948
      %950 = vmatmul.f32.gmra.mxu0 %v875
      %v951 = vpop.f32.mrf.mxu0
      %v952 = vadd.f32 0.0, %v951
      %953 = vmatmul.f32.gmra.mxu0 %v878
      %v954 = vpop.f32.mrf.mxu0
      %v955 = vadd.f32 0.0, %v954
      %956 = vmatmul.f32.gmra.mxu0 %v881
      %v957 = vpop.f32.mrf.mxu0
      %v958 = vadd.f32 0.0, %v957
      %959 = vmatmul.f32.gmra.mxu0 %v884
      %v960 = vpop.f32.mrf.mxu0
      %v961 = vadd.f32 0.0, %v960
      %962 = vmatmul.f32.gmra.mxu0 %v887
      %v963 = vpop.f32.mrf.mxu0
      %v964 = vadd.f32 0.0, %v963
      %965 = vmatmul.f32.gmra.mxu0 %v890
      %v966 = vpop.f32.mrf.mxu0
      %v967 = vadd.f32 0.0, %v966
      %968 = vmatmul.f32.gmra.mxu0 %v893
      %v969 = vpop.f32.mrf.mxu0
      %v970 = vadd.f32 0.0, %v969
      %971 = vmatmul.f32.gmra.mxu0 %v896
      %v972 = vpop.f32.mrf.mxu0
      %v973 = vadd.f32 0.0, %v972
      %974 = vmatmul.f32.gmra.mxu0 %v899
      %v975 = vpop.f32.mrf.mxu0
      %v976 = vadd.f32 0.0, %v975
      %977 = vmatmul.f32.gmra.mxu0 %v902
      %v978 = vpop.f32.mrf.mxu0
      %v979 = vadd.f32 0.0, %v978
      %980 = vmatmul.f32.gmra.mxu0 %v905
      %v981 = vpop.f32.mrf.mxu0
      %v982 = vadd.f32 0.0, %v981
      %983 = vdwg.mxu0
      %v984 = vld [vmem:[%s9] sm:$0x1]
      %vm985 = vcmask 293888
      %986 = vst.msk [vmem:[#allocation2 + $0x1] sm:$0xff] %vm985, %v925
      %987 = vst.msk [vmem:[#allocation2 + $0x9] sm:$0xff] %vm985, %v928
      %988 = vst.msk [vmem:[#allocation2 + $0x19] sm:$0xff] %vm985, %v931
      %989 = vst.msk [vmem:[#allocation2 + $0x21] sm:$0xff] %vm985, %v934
      %990 = vst.msk [vmem:[#allocation2 + $0x31] sm:$0xff] %vm985, %v937
      %991 = vst.msk [vmem:[#allocation2 + $0x39] sm:$0xff] %vm985, %v940
      %992 = vst.msk [vmem:[#allocation2 + $0x49] sm:$0xff] %vm985, %v943
      %993 = vst.msk [vmem:[#allocation2 + $0x51] sm:$0xff] %vm985, %v946
      %994 = vst.msk [vmem:[#allocation2 + $0x61] sm:$0xff] %vm985, %v949
      %995 = vst.msk [vmem:[#allocation2 + $0x69] sm:$0xff] %vm985, %v952
      %996 = vst.msk [vmem:[#allocation2 + $0x79] sm:$0xff] %vm985, %v955
      %997 = vst.msk [vmem:[#allocation2 + $0x81] sm:$0xff] %vm985, %v958
      %998 = vst.msk [vmem:[#allocation2 + $0x91] sm:$0xff] %vm985, %v961
      %999 = vst.msk [vmem:[#allocation2 + $0x99] sm:$0xff] %vm985, %v964
      %1000 = vst.msk [vmem:[#allocation2 + $0xa9] sm:$0xff] %vm985, %v967
      %1001 = vst.msk [vmem:[#allocation2 + $0xb1] sm:$0xff] %vm985, %v970
      %1002 = vst.msk [vmem:[#allocation2 + $0xc1] sm:$0xff] %vm985, %v973
      %1003 = vst.msk [vmem:[#allocation2 + $0xc9] sm:$0xff] %vm985, %v976
      %1004 = vst.msk [vmem:[#allocation2 + $0xd9] sm:$0xff] %vm985, %v979
      %1005 = vst.msk [vmem:[#allocation2 + $0xe1] sm:$0xff] %vm985, %v982
      %vm1006 = vcmask 286720
      %1007 = vst.msk [vmem:[#allocation2] sm:$0x1] %vm1006, %v984
      %1008 = vst.msk [vmem:[#allocation2 + $0x18] sm:$0x1] %vm1006, %v984
      %1009 = vst.msk [vmem:[#allocation2 + $0x30] sm:$0x1] %vm1006, %v984
      %1010 = vst.msk [vmem:[#allocation2 + $0x48] sm:$0x1] %vm1006, %v984
      %1011 = vst.msk [vmem:[#allocation2 + $0x60] sm:$0x1] %vm1006, %v984
      %1012 = vst.msk [vmem:[#allocation2 + $0x78] sm:$0x1] %vm1006, %v984
      %1013 = vst.msk [vmem:[#allocation2 + $0x90] sm:$0x1] %vm1006, %v984
      %1014 = vst.msk [vmem:[#allocation2 + $0xa8] sm:$0x1] %vm1006, %v984
      %1015 = vst.msk [vmem:[#allocation2 + $0xc0] sm:$0x1] %vm1006, %v984
      %1016 = vst.msk [vmem:[#allocation2 + $0xd8] sm:$0x1] %vm1006, %v984
      %1017 = vst.msk [vmem:[#allocation2 + $0x11] sm:$0x1] %vm1006, %v984
      %1018 = vst.msk [vmem:[#allocation2 + $0x29] sm:$0x1] %vm1006, %v984
      %1019 = vst.msk [vmem:[#allocation2 + $0x41] sm:$0x1] %vm1006, %v984
      %1020 = vst.msk [vmem:[#allocation2 + $0x59] sm:$0x1] %vm1006, %v984
      %1021 = vst.msk [vmem:[#allocation2 + $0x71] sm:$0x1] %vm1006, %v984
      %1022 = vst.msk [vmem:[#allocation2 + $0x89] sm:$0x1] %vm1006, %v984
      %1023 = vst.msk [vmem:[#allocation2 + $0xa1] sm:$0x1] %vm1006, %v984
      %1024 = vst.msk [vmem:[#allocation2 + $0xb9] sm:$0x1] %vm1006, %v984
      %1025 = vst.msk [vmem:[#allocation2 + $0xd1] sm:$0x1] %vm1006, %v984
      %1026 = vst.msk [vmem:[#allocation2 + $0xe9] sm:$0x1] %vm1006, %v984
      %v1028 = vperm.slane %v984, 0
      %p1030 = scmp.eq.s32.totalorder %s28, 0
      // Predicated region
      $region61: #{affine_coupling_forward.1} parent=59 // pred_check
        %p1031 = pneg %p1030
      $region62: #{affine_coupling_forward.1} parent=59 // pred_check_branch
        %1033 = sbr.rel (%p1031) target = $region64
      $region63: #{affine_coupling_forward.1} parent=59 // pred_region
        %1034 = vst.msk [vmem:[#allocation2] sm:$0xff] %vm985, %v1028
        %1035 = vst.msk [vmem:[#allocation2 + $0x8] sm:$0xff] %vm985, %v1028
        %vm1036 = vcmask 287744
        %1037 = vst.msk [vmem:[#allocation2 + $0x10] sm:$0x3] %vm1036, %v1028
      $region64: #{affine_coupling_forward.1} parent=59 // pred_fallthru
        _
      %p1038 = scmp.eq.s32.totalorder %s28, 1
      // Predicated region
      $region65: #{affine_coupling_forward.1} parent=59 // pred_check
        %p1039 = pneg %p1038
      $region66: #{affine_coupling_forward.1} parent=59 // pred_check_branch
        %1041 = sbr.rel (%p1039) target = $region68
      $region67: #{affine_coupling_forward.1} parent=59 // pred_region
        %s1042 = scalar_lea.vmem [#allocation2], 216
        %1043 = vst.msk [vmem:[%s1042] sm:$0xff] %vm985, %v1028
        %1044 = vst.msk [vmem:[%s1042 + $0x8] sm:$0xff] %vm985, %v1028
        %vm1045 = vcmask 287744
        %1046 = vst.msk [vmem:[%s1042 + $0x10] sm:$0x3] %vm1045, %v1028
      $region68: #{affine_coupling_forward.1} parent=59 // pred_fallthru
        _
      %v1047 = vld [vmem:[#allocation2] sm:$0xff]
      %v1048 = vld [vmem:[#allocation2 + $0x8] sm:$0xff]
      %v1049 = vld [vmem:[#allocation2 + $0x18] sm:$0xff]
      %v1050 = vld [vmem:[#allocation2 + $0x20] sm:$0xff]
      %v1051 = vld [vmem:[#allocation2 + $0x30] sm:$0xff]
      %v1052 = vld [vmem:[#allocation2 + $0x38] sm:$0xff]
      %v1053 = vld [vmem:[#allocation2 + $0x48] sm:$0xff]
      %v1054 = vld [vmem:[#allocation2 + $0x50] sm:$0xff]
      %v1055 = vld [vmem:[#allocation2 + $0x60] sm:$0xff]
      %v1056 = vld [vmem:[#allocation2 + $0x68] sm:$0xff]
      %v1057 = vld [vmem:[#allocation2 + $0x78] sm:$0xff]
      %v1058 = vld [vmem:[#allocation2 + $0x80] sm:$0xff]
      %v1059 = vld [vmem:[#allocation2 + $0x90] sm:$0xff]
      %v1060 = vld [vmem:[#allocation2 + $0x98] sm:$0xff]
      %v1061 = vld [vmem:[#allocation2 + $0xa8] sm:$0xff]
      %v1062 = vld [vmem:[#allocation2 + $0xb0] sm:$0xff]
      %v1063 = vadd.f32 %v1047, 0.0
      %v1064 = vadd.f32 %v1048, 0.0
      %v1065 = vadd.f32 %v1049, 0.0
      %v1066 = vadd.f32 %v1050, 0.0
      %v1067 = vadd.f32 %v1051, 0.0
      %v1068 = vadd.f32 %v1052, 0.0
      %v1069 = vadd.f32 %v1053, 0.0
      %v1070 = vadd.f32 %v1054, 0.0
      %v1071 = vadd.f32 %v1055, 0.0
      %v1072 = vadd.f32 %v1056, 0.0
      %v1073 = vadd.f32 %v1057, 0.0
      %v1074 = vadd.f32 %v1058, 0.0
      %v1075 = vadd.f32 %v1059, 0.0
      %v1076 = vadd.f32 %v1060, 0.0
      %v1077 = vadd.f32 %v1061, 0.0
      %v1078 = vadd.f32 %v1062, 0.0
      %v1079 = vld [vmem:[#allocation2 + $0x1] sm:$0xff]
      %v1080 = vld [vmem:[#allocation2 + $0x9] sm:$0xff]
      %v1081 = vld [vmem:[#allocation2 + $0x19] sm:$0xff]
      %v1082 = vld [vmem:[#allocation2 + $0x21] sm:$0xff]
      %v1083 = vld [vmem:[#allocation2 + $0x31] sm:$0xff]
      %v1084 = vld [vmem:[#allocation2 + $0x39] sm:$0xff]
      %v1085 = vld [vmem:[#allocation2 + $0x49] sm:$0xff]
      %v1086 = vld [vmem:[#allocation2 + $0x51] sm:$0xff]
      %v1087 = vld [vmem:[#allocation2 + $0x61] sm:$0xff]
      %v1088 = vld [vmem:[#allocation2 + $0x69] sm:$0xff]
      %v1089 = vld [vmem:[#allocation2 + $0x79] sm:$0xff]
      %v1090 = vld [vmem:[#allocation2 + $0x81] sm:$0xff]
      %v1091 = vld [vmem:[#allocation2 + $0x91] sm:$0xff]
      %v1092 = vld [vmem:[#allocation2 + $0x99] sm:$0xff]
      %v1093 = vld [vmem:[#allocation2 + $0xa9] sm:$0xff]
      %v1094 = vld [vmem:[#allocation2 + $0xb1] sm:$0xff]
      %1111 = vrot.lane.b32.xlu0 %v1079, 124
      %v1112 = vpop.permute.xlu0 %1111
      %1113 = vrot.lane.b32.xlu0 %v1080, 124
      %v1114 = vpop.permute.xlu0 %1113
      %1115 = vrot.lane.b32.xlu0 %v1081, 124
      %v1116 = vpop.permute.xlu0 %1115
      %1117 = vrot.lane.b32.xlu0 %v1082, 124
      %v1118 = vpop.permute.xlu0 %1117
      %1119 = vrot.lane.b32.xlu0 %v1083, 124
      %v1120 = vpop.permute.xlu0 %1119
      %1121 = vrot.lane.b32.xlu0 %v1084, 124
      %v1122 = vpop.permute.xlu0 %1121
      %1123 = vrot.lane.b32.xlu0 %v1085, 124
      %v1124 = vpop.permute.xlu0 %1123
      %1125 = vrot.lane.b32.xlu0 %v1086, 124
      %v1126 = vpop.permute.xlu0 %1125
      %1127 = vrot.lane.b32.xlu0 %v1087, 124
      %v1128 = vpop.permute.xlu0 %1127
      %1129 = vrot.lane.b32.xlu0 %v1088, 124
      %v1130 = vpop.permute.xlu0 %1129
      %1131 = vrot.lane.b32.xlu0 %v1089, 124
      %v1132 = vpop.permute.xlu0 %1131
      %1133 = vrot.lane.b32.xlu0 %v1090, 124
      %v1134 = vpop.permute.xlu0 %1133
      %1135 = vrot.lane.b32.xlu0 %v1091, 124
      %v1136 = vpop.permute.xlu0 %1135
      %1137 = vrot.lane.b32.xlu0 %v1092, 124
      %v1138 = vpop.permute.xlu0 %1137
      %1139 = vrot.lane.b32.xlu0 %v1093, 124
      %v1140 = vpop.permute.xlu0 %1139
      %1141 = vrot.lane.b32.xlu0 %v1094, 124
      %v1142 = vpop.permute.xlu0 %1141
      %v1159 = vadd.f32 %v1063, %v1112
      %v1160 = vadd.f32 %v1064, %v1114
      %v1161 = vadd.f32 %v1065, %v1116
      %v1162 = vadd.f32 %v1066, %v1118
      %v1163 = vadd.f32 %v1067, %v1120
      %v1164 = vadd.f32 %v1068, %v1122
      %v1165 = vadd.f32 %v1069, %v1124
      %v1166 = vadd.f32 %v1070, %v1126
      %v1167 = vadd.f32 %v1071, %v1128
      %v1168 = vadd.f32 %v1072, %v1130
      %v1169 = vadd.f32 %v1073, %v1132
      %v1170 = vadd.f32 %v1074, %v1134
      %v1171 = vadd.f32 %v1075, %v1136
      %v1172 = vadd.f32 %v1076, %v1138
      %v1173 = vadd.f32 %v1077, %v1140
      %v1174 = vadd.f32 %v1078, %v1142
      %v1175 = vld [vmem:[#allocation2 + $0x2] sm:$0xff]
      %v1176 = vld [vmem:[#allocation2 + $0xa] sm:$0xff]
      %v1177 = vld [vmem:[#allocation2 + $0x1a] sm:$0xff]
      %v1178 = vld [vmem:[#allocation2 + $0x22] sm:$0xff]
      %v1179 = vld [vmem:[#allocation2 + $0x32] sm:$0xff]
      %v1180 = vld [vmem:[#allocation2 + $0x3a] sm:$0xff]
      %v1181 = vld [vmem:[#allocation2 + $0x4a] sm:$0xff]
      %v1182 = vld [vmem:[#allocation2 + $0x52] sm:$0xff]
      %v1183 = vld [vmem:[#allocation2 + $0x62] sm:$0xff]
      %v1184 = vld [vmem:[#allocation2 + $0x6a] sm:$0xff]
      %v1185 = vld [vmem:[#allocation2 + $0x7a] sm:$0xff]
      %v1186 = vld [vmem:[#allocation2 + $0x82] sm:$0xff]
      %v1187 = vld [vmem:[#allocation2 + $0x92] sm:$0xff]
      %v1188 = vld [vmem:[#allocation2 + $0x9a] sm:$0xff]
      %v1189 = vld [vmem:[#allocation2 + $0xaa] sm:$0xff]
      %v1190 = vld [vmem:[#allocation2 + $0xb2] sm:$0xff]
      %1207 = vrot.lane.b32.xlu0 %v1175, 120
      %v1208 = vpop.permute.xlu0 %1207
      %1209 = vrot.lane.b32.xlu0 %v1176, 120
      %v1210 = vpop.permute.xlu0 %1209
      %1211 = vrot.lane.b32.xlu0 %v1177, 120
      %v1212 = vpop.permute.xlu0 %1211
      %1213 = vrot.lane.b32.xlu0 %v1178, 120
      %v1214 = vpop.permute.xlu0 %1213
      %1215 = vrot.lane.b32.xlu0 %v1179, 120
      %v1216 = vpop.permute.xlu0 %1215
      %1217 = vrot.lane.b32.xlu0 %v1180, 120
      %v1218 = vpop.permute.xlu0 %1217
      %1219 = vrot.lane.b32.xlu0 %v1181, 120
      %v1220 = vpop.permute.xlu0 %1219
      %1221 = vrot.lane.b32.xlu0 %v1182, 120
      %v1222 = vpop.permute.xlu0 %1221
      %1223 = vrot.lane.b32.xlu0 %v1183, 120
      %v1224 = vpop.permute.xlu0 %1223
      %1225 = vrot.lane.b32.xlu0 %v1184, 120
      %v1226 = vpop.permute.xlu0 %1225
      %1227 = vrot.lane.b32.xlu0 %v1185, 120
      %v1228 = vpop.permute.xlu0 %1227
      %1229 = vrot.lane.b32.xlu0 %v1186, 120
      %v1230 = vpop.permute.xlu0 %1229
      %1231 = vrot.lane.b32.xlu0 %v1187, 120
      %v1232 = vpop.permute.xlu0 %1231
      %1233 = vrot.lane.b32.xlu0 %v1188, 120
      %v1234 = vpop.permute.xlu0 %1233
      %1235 = vrot.lane.b32.xlu0 %v1189, 120
      %v1236 = vpop.permute.xlu0 %1235
      %1237 = vrot.lane.b32.xlu0 %v1190, 120
      %v1238 = vpop.permute.xlu0 %1237
      %v1255 = vadd.f32 %v1159, %v1208
      %v1256 = vadd.f32 %v1160, %v1210
      %v1257 = vadd.f32 %v1161, %v1212
      %v1258 = vadd.f32 %v1162, %v1214
      %v1259 = vadd.f32 %v1163, %v1216
      %v1260 = vadd.f32 %v1164, %v1218
      %v1261 = vadd.f32 %v1165, %v1220
      %v1262 = vadd.f32 %v1166, %v1222
      %v1263 = vadd.f32 %v1167, %v1224
      %v1264 = vadd.f32 %v1168, %v1226
      %v1265 = vadd.f32 %v1169, %v1228
      %v1266 = vadd.f32 %v1170, %v1230
      %v1267 = vadd.f32 %v1171, %v1232
      %v1268 = vadd.f32 %v1172, %v1234
      %v1269 = vadd.f32 %v1173, %v1236
      %v1270 = vadd.f32 %v1174, %v1238
      %s1271 = scalar_lea.vmem [#allocation2], 24
      %v1272 = vld [vmem:[%s1271] sm:$0xff]
      %v1273 = vld [vmem:[%s1271 + $0x8] sm:$0xff]
      %v1274 = vld [vmem:[%s1271 + $0x18] sm:$0xff]
      %v1275 = vld [vmem:[%s1271 + $0x20] sm:$0xff]
      %v1276 = vld [vmem:[%s1271 + $0x30] sm:$0xff]
      %v1277 = vld [vmem:[%s1271 + $0x38] sm:$0xff]
      %v1278 = vld [vmem:[%s1271 + $0x48] sm:$0xff]
      %v1279 = vld [vmem:[%s1271 + $0x50] sm:$0xff]
      %v1280 = vld [vmem:[%s1271 + $0x60] sm:$0xff]
      %v1281 = vld [vmem:[%s1271 + $0x68] sm:$0xff]
      %v1282 = vld [vmem:[%s1271 + $0x78] sm:$0xff]
      %v1283 = vld [vmem:[%s1271 + $0x80] sm:$0xff]
      %v1284 = vld [vmem:[%s1271 + $0x90] sm:$0xff]
      %v1285 = vld [vmem:[%s1271 + $0x98] sm:$0xff]
      %v1286 = vld [vmem:[%s1271 + $0xa8] sm:$0xff]
      %v1287 = vld [vmem:[%s1271 + $0xb0] sm:$0xff]
      %1304 = vrot.lane.b32.xlu0 %v1272, 116
      %v1305 = vpop.permute.xlu0 %1304
      %1306 = vrot.lane.b32.xlu0 %v1273, 116
      %v1307 = vpop.permute.xlu0 %1306
      %1308 = vrot.lane.b32.xlu0 %v1274, 116
      %v1309 = vpop.permute.xlu0 %1308
      %1310 = vrot.lane.b32.xlu0 %v1275, 116
      %v1311 = vpop.permute.xlu0 %1310
      %1312 = vrot.lane.b32.xlu0 %v1276, 116
      %v1313 = vpop.permute.xlu0 %1312
      %1314 = vrot.lane.b32.xlu0 %v1277, 116
      %v1315 = vpop.permute.xlu0 %1314
      %1316 = vrot.lane.b32.xlu0 %v1278, 116
      %v1317 = vpop.permute.xlu0 %1316
      %1318 = vrot.lane.b32.xlu0 %v1279, 116
      %v1319 = vpop.permute.xlu0 %1318
      %1320 = vrot.lane.b32.xlu0 %v1280, 116
      %v1321 = vpop.permute.xlu0 %1320
      %1322 = vrot.lane.b32.xlu0 %v1281, 116
      %v1323 = vpop.permute.xlu0 %1322
      %1324 = vrot.lane.b32.xlu0 %v1282, 116
      %v1325 = vpop.permute.xlu0 %1324
      %1326 = vrot.lane.b32.xlu0 %v1283, 116
      %v1327 = vpop.permute.xlu0 %1326
      %1328 = vrot.lane.b32.xlu0 %v1284, 116
      %v1329 = vpop.permute.xlu0 %1328
      %1330 = vrot.lane.b32.xlu0 %v1285, 116
      %v1331 = vpop.permute.xlu0 %1330
      %1332 = vrot.lane.b32.xlu0 %v1286, 116
      %v1333 = vpop.permute.xlu0 %1332
      %1334 = vrot.lane.b32.xlu0 %v1287, 116
      %v1335 = vpop.permute.xlu0 %1334
      %v1352 = vadd.f32 %v1255, %v1305
      %v1353 = vadd.f32 %v1256, %v1307
      %v1354 = vadd.f32 %v1257, %v1309
      %v1355 = vadd.f32 %v1258, %v1311
      %v1356 = vadd.f32 %v1259, %v1313
      %v1357 = vadd.f32 %v1260, %v1315
      %v1358 = vadd.f32 %v1261, %v1317
      %v1359 = vadd.f32 %v1262, %v1319
      %v1360 = vadd.f32 %v1263, %v1321
      %v1361 = vadd.f32 %v1264, %v1323
      %v1362 = vadd.f32 %v1265, %v1325
      %v1363 = vadd.f32 %v1266, %v1327
      %v1364 = vadd.f32 %v1267, %v1329
      %v1365 = vadd.f32 %v1268, %v1331
      %v1366 = vadd.f32 %v1269, %v1333
      %v1367 = vadd.f32 %v1270, %v1335
      %v1368 = vld [vmem:[%s1271 + $0x1] sm:$0xff]
      %v1369 = vld [vmem:[%s1271 + $0x9] sm:$0xff]
      %v1370 = vld [vmem:[%s1271 + $0x19] sm:$0xff]
      %v1371 = vld [vmem:[%s1271 + $0x21] sm:$0xff]
      %v1372 = vld [vmem:[%s1271 + $0x31] sm:$0xff]
      %v1373 = vld [vmem:[%s1271 + $0x39] sm:$0xff]
      %v1374 = vld [vmem:[%s1271 + $0x49] sm:$0xff]
      %v1375 = vld [vmem:[%s1271 + $0x51] sm:$0xff]
      %v1376 = vld [vmem:[%s1271 + $0x61] sm:$0xff]
      %v1377 = vld [vmem:[%s1271 + $0x69] sm:$0xff]
      %v1378 = vld [vmem:[%s1271 + $0x79] sm:$0xff]
      %v1379 = vld [vmem:[%s1271 + $0x81] sm:$0xff]
      %v1380 = vld [vmem:[%s1271 + $0x91] sm:$0xff]
      %v1381 = vld [vmem:[%s1271 + $0x99] sm:$0xff]
      %v1382 = vld [vmem:[%s1271 + $0xa9] sm:$0xff]
      %v1383 = vld [vmem:[%s1271 + $0xb1] sm:$0xff]
      %1400 = vrot.lane.b32.xlu0 %v1368, 112
      %v1401 = vpop.permute.xlu0 %1400
      %1402 = vrot.lane.b32.xlu0 %v1369, 112
      %v1403 = vpop.permute.xlu0 %1402
      %1404 = vrot.lane.b32.xlu0 %v1370, 112
      %v1405 = vpop.permute.xlu0 %1404
      %1406 = vrot.lane.b32.xlu0 %v1371, 112
      %v1407 = vpop.permute.xlu0 %1406
      %1408 = vrot.lane.b32.xlu0 %v1372, 112
      %v1409 = vpop.permute.xlu0 %1408
      %1410 = vrot.lane.b32.xlu0 %v1373, 112
      %v1411 = vpop.permute.xlu0 %1410
      %1412 = vrot.lane.b32.xlu0 %v1374, 112
      %v1413 = vpop.permute.xlu0 %1412
      %1414 = vrot.lane.b32.xlu0 %v1375, 112
      %v1415 = vpop.permute.xlu0 %1414
      %1416 = vrot.lane.b32.xlu0 %v1376, 112
      %v1417 = vpop.permute.xlu0 %1416
      %1418 = vrot.lane.b32.xlu0 %v1377, 112
      %v1419 = vpop.permute.xlu0 %1418
      %1420 = vrot.lane.b32.xlu0 %v1378, 112
      %v1421 = vpop.permute.xlu0 %1420
      %1422 = vrot.lane.b32.xlu0 %v1379, 112
      %v1423 = vpop.permute.xlu0 %1422
      %1424 = vrot.lane.b32.xlu0 %v1380, 112
      %v1425 = vpop.permute.xlu0 %1424
      %1426 = vrot.lane.b32.xlu0 %v1381, 112
      %v1427 = vpop.permute.xlu0 %1426
      %1428 = vrot.lane.b32.xlu0 %v1382, 112
      %v1429 = vpop.permute.xlu0 %1428
      %1430 = vrot.lane.b32.xlu0 %v1383, 112
      %v1431 = vpop.permute.xlu0 %1430
      %v1448 = vadd.f32 %v1352, %v1401
      %v1449 = vadd.f32 %v1353, %v1403
      %v1450 = vadd.f32 %v1354, %v1405
      %v1451 = vadd.f32 %v1355, %v1407
      %v1452 = vadd.f32 %v1356, %v1409
      %v1453 = vadd.f32 %v1357, %v1411
      %v1454 = vadd.f32 %v1358, %v1413
      %v1455 = vadd.f32 %v1359, %v1415
      %v1456 = vadd.f32 %v1360, %v1417
      %v1457 = vadd.f32 %v1361, %v1419
      %v1458 = vadd.f32 %v1362, %v1421
      %v1459 = vadd.f32 %v1363, %v1423
      %v1460 = vadd.f32 %v1364, %v1425
      %v1461 = vadd.f32 %v1365, %v1427
      %v1462 = vadd.f32 %v1366, %v1429
      %v1463 = vadd.f32 %v1367, %v1431
      %v1464 = vld [vmem:[%s1271 + $0x2] sm:$0xff]
      %v1465 = vld [vmem:[%s1271 + $0xa] sm:$0xff]
      %v1466 = vld [vmem:[%s1271 + $0x1a] sm:$0xff]
      %v1467 = vld [vmem:[%s1271 + $0x22] sm:$0xff]
      %v1468 = vld [vmem:[%s1271 + $0x32] sm:$0xff]
      %v1469 = vld [vmem:[%s1271 + $0x3a] sm:$0xff]
      %v1470 = vld [vmem:[%s1271 + $0x4a] sm:$0xff]
      %v1471 = vld [vmem:[%s1271 + $0x52] sm:$0xff]
      %v1472 = vld [vmem:[%s1271 + $0x62] sm:$0xff]
      %v1473 = vld [vmem:[%s1271 + $0x6a] sm:$0xff]
      %v1474 = vld [vmem:[%s1271 + $0x7a] sm:$0xff]
      %v1475 = vld [vmem:[%s1271 + $0x82] sm:$0xff]
      %v1476 = vld [vmem:[%s1271 + $0x92] sm:$0xff]
      %v1477 = vld [vmem:[%s1271 + $0x9a] sm:$0xff]
      %v1478 = vld [vmem:[%s1271 + $0xaa] sm:$0xff]
      %v1479 = vld [vmem:[%s1271 + $0xb2] sm:$0xff]
      %1496 = vrot.lane.b32.xlu0 %v1464, 108
      %v1497 = vpop.permute.xlu0 %1496
      %1498 = vrot.lane.b32.xlu0 %v1465, 108
      %v1499 = vpop.permute.xlu0 %1498
      %1500 = vrot.lane.b32.xlu0 %v1466, 108
      %v1501 = vpop.permute.xlu0 %1500
      %1502 = vrot.lane.b32.xlu0 %v1467, 108
      %v1503 = vpop.permute.xlu0 %1502
      %1504 = vrot.lane.b32.xlu0 %v1468, 108
      %v1505 = vpop.permute.xlu0 %1504
      %1506 = vrot.lane.b32.xlu0 %v1469, 108
      %v1507 = vpop.permute.xlu0 %1506
      %1508 = vrot.lane.b32.xlu0 %v1470, 108
      %v1509 = vpop.permute.xlu0 %1508
      %1510 = vrot.lane.b32.xlu0 %v1471, 108
      %v1511 = vpop.permute.xlu0 %1510
      %1512 = vrot.lane.b32.xlu0 %v1472, 108
      %v1513 = vpop.permute.xlu0 %1512
      %1514 = vrot.lane.b32.xlu0 %v1473, 108
      %v1515 = vpop.permute.xlu0 %1514
      %1516 = vrot.lane.b32.xlu0 %v1474, 108
      %v1517 = vpop.permute.xlu0 %1516
      %1518 = vrot.lane.b32.xlu0 %v1475, 108
      %v1519 = vpop.permute.xlu0 %1518
      %1520 = vrot.lane.b32.xlu0 %v1476, 108
      %v1521 = vpop.permute.xlu0 %1520
      %1522 = vrot.lane.b32.xlu0 %v1477, 108
      %v1523 = vpop.permute.xlu0 %1522
      %1524 = vrot.lane.b32.xlu0 %v1478, 108
      %v1525 = vpop.permute.xlu0 %1524
      %1526 = vrot.lane.b32.xlu0 %v1479, 108
      %v1527 = vpop.permute.xlu0 %1526
      %v1544 = vadd.f32 %v1448, %v1497
      %v1545 = vadd.f32 %v1449, %v1499
      %v1546 = vadd.f32 %v1450, %v1501
      %v1547 = vadd.f32 %v1451, %v1503
      %v1548 = vadd.f32 %v1452, %v1505
      %v1549 = vadd.f32 %v1453, %v1507
      %v1550 = vadd.f32 %v1454, %v1509
      %v1551 = vadd.f32 %v1455, %v1511
      %v1552 = vadd.f32 %v1456, %v1513
      %v1553 = vadd.f32 %v1457, %v1515
      %v1554 = vadd.f32 %v1458, %v1517
      %v1555 = vadd.f32 %v1459, %v1519
      %v1556 = vadd.f32 %v1460, %v1521
      %v1557 = vadd.f32 %v1461, %v1523
      %v1558 = vadd.f32 %v1462, %v1525
      %v1559 = vadd.f32 %v1463, %v1527
      %s1560 = scalar_lea.vmem [#allocation2], 48
      %v1561 = vld [vmem:[%s1560] sm:$0xff]
      %v1562 = vld [vmem:[%s1560 + $0x8] sm:$0xff]
      %v1563 = vld [vmem:[%s1560 + $0x18] sm:$0xff]
      %v1564 = vld [vmem:[%s1560 + $0x20] sm:$0xff]
      %v1565 = vld [vmem:[%s1560 + $0x30] sm:$0xff]
      %v1566 = vld [vmem:[%s1560 + $0x38] sm:$0xff]
      %v1567 = vld [vmem:[%s1560 + $0x48] sm:$0xff]
      %v1568 = vld [vmem:[%s1560 + $0x50] sm:$0xff]
      %v1569 = vld [vmem:[%s1560 + $0x60] sm:$0xff]
      %v1570 = vld [vmem:[%s1560 + $0x68] sm:$0xff]
      %v1571 = vld [vmem:[%s1560 + $0x78] sm:$0xff]
      %v1572 = vld [vmem:[%s1560 + $0x80] sm:$0xff]
      %v1573 = vld [vmem:[%s1560 + $0x90] sm:$0xff]
      %v1574 = vld [vmem:[%s1560 + $0x98] sm:$0xff]
      %v1575 = vld [vmem:[%s1560 + $0xa8] sm:$0xff]
      %v1576 = vld [vmem:[%s1560 + $0xb0] sm:$0xff]
      %1593 = vrot.lane.b32.xlu0 %v1561, 104
      %v1594 = vpop.permute.xlu0 %1593
      %1595 = vrot.lane.b32.xlu0 %v1562, 104
      %v1596 = vpop.permute.xlu0 %1595
      %1597 = vrot.lane.b32.xlu0 %v1563, 104
      %v1598 = vpop.permute.xlu0 %1597
      %1599 = vrot.lane.b32.xlu0 %v1564, 104
      %v1600 = vpop.permute.xlu0 %1599
      %1601 = vrot.lane.b32.xlu0 %v1565, 104
      %v1602 = vpop.permute.xlu0 %1601
      %1603 = vrot.lane.b32.xlu0 %v1566, 104
      %v1604 = vpop.permute.xlu0 %1603
      %1605 = vrot.lane.b32.xlu0 %v1567, 104
      %v1606 = vpop.permute.xlu0 %1605
      %1607 = vrot.lane.b32.xlu0 %v1568, 104
      %v1608 = vpop.permute.xlu0 %1607
      %1609 = vrot.lane.b32.xlu0 %v1569, 104
      %v1610 = vpop.permute.xlu0 %1609
      %1611 = vrot.lane.b32.xlu0 %v1570, 104
      %v1612 = vpop.permute.xlu0 %1611
      %1613 = vrot.lane.b32.xlu0 %v1571, 104
      %v1614 = vpop.permute.xlu0 %1613
      %1615 = vrot.lane.b32.xlu0 %v1572, 104
      %v1616 = vpop.permute.xlu0 %1615
      %1617 = vrot.lane.b32.xlu0 %v1573, 104
      %v1618 = vpop.permute.xlu0 %1617
      %1619 = vrot.lane.b32.xlu0 %v1574, 104
      %v1620 = vpop.permute.xlu0 %1619
      %1621 = vrot.lane.b32.xlu0 %v1575, 104
      %v1622 = vpop.permute.xlu0 %1621
      %1623 = vrot.lane.b32.xlu0 %v1576, 104
      %v1624 = vpop.permute.xlu0 %1623
      %v1641 = vadd.f32 %v1544, %v1594
      %v1642 = vadd.f32 %v1545, %v1596
      %v1643 = vadd.f32 %v1546, %v1598
      %v1644 = vadd.f32 %v1547, %v1600
      %v1645 = vadd.f32 %v1548, %v1602
      %v1646 = vadd.f32 %v1549, %v1604
      %v1647 = vadd.f32 %v1550, %v1606
      %v1648 = vadd.f32 %v1551, %v1608
      %v1649 = vadd.f32 %v1552, %v1610
      %v1650 = vadd.f32 %v1553, %v1612
      %v1651 = vadd.f32 %v1554, %v1614
      %v1652 = vadd.f32 %v1555, %v1616
      %v1653 = vadd.f32 %v1556, %v1618
      %v1654 = vadd.f32 %v1557, %v1620
      %v1655 = vadd.f32 %v1558, %v1622
      %v1656 = vadd.f32 %v1559, %v1624
      %v1657 = vld [vmem:[%s1560 + $0x1] sm:$0xff]
      %v1658 = vld [vmem:[%s1560 + $0x9] sm:$0xff]
      %v1659 = vld [vmem:[%s1560 + $0x19] sm:$0xff]
      %v1660 = vld [vmem:[%s1560 + $0x21] sm:$0xff]
      %v1661 = vld [vmem:[%s1560 + $0x31] sm:$0xff]
      %v1662 = vld [vmem:[%s1560 + $0x39] sm:$0xff]
      %v1663 = vld [vmem:[%s1560 + $0x49] sm:$0xff]
      %v1664 = vld [vmem:[%s1560 + $0x51] sm:$0xff]
      %v1665 = vld [vmem:[%s1560 + $0x61] sm:$0xff]
      %v1666 = vld [vmem:[%s1560 + $0x69] sm:$0xff]
      %v1667 = vld [vmem:[%s1560 + $0x79] sm:$0xff]
      %v1668 = vld [vmem:[%s1560 + $0x81] sm:$0xff]
      %v1669 = vld [vmem:[%s1560 + $0x91] sm:$0xff]
      %v1670 = vld [vmem:[%s1560 + $0x99] sm:$0xff]
      %v1671 = vld [vmem:[%s1560 + $0xa9] sm:$0xff]
      %v1672 = vld [vmem:[%s1560 + $0xb1] sm:$0xff]
      %1689 = vrot.lane.b32.xlu0 %v1657, 100
      %v1690 = vpop.permute.xlu0 %1689
      %1691 = vrot.lane.b32.xlu0 %v1658, 100
      %v1692 = vpop.permute.xlu0 %1691
      %1693 = vrot.lane.b32.xlu0 %v1659, 100
      %v1694 = vpop.permute.xlu0 %1693
      %1695 = vrot.lane.b32.xlu0 %v1660, 100
      %v1696 = vpop.permute.xlu0 %1695
      %1697 = vrot.lane.b32.xlu0 %v1661, 100
      %v1698 = vpop.permute.xlu0 %1697
      %1699 = vrot.lane.b32.xlu0 %v1662, 100
      %v1700 = vpop.permute.xlu0 %1699
      %1701 = vrot.lane.b32.xlu0 %v1663, 100
      %v1702 = vpop.permute.xlu0 %1701
      %1703 = vrot.lane.b32.xlu0 %v1664, 100
      %v1704 = vpop.permute.xlu0 %1703
      %1705 = vrot.lane.b32.xlu0 %v1665, 100
      %v1706 = vpop.permute.xlu0 %1705
      %1707 = vrot.lane.b32.xlu0 %v1666, 100
      %v1708 = vpop.permute.xlu0 %1707
      %1709 = vrot.lane.b32.xlu0 %v1667, 100
      %v1710 = vpop.permute.xlu0 %1709
      %1711 = vrot.lane.b32.xlu0 %v1668, 100
      %v1712 = vpop.permute.xlu0 %1711
      %1713 = vrot.lane.b32.xlu0 %v1669, 100
      %v1714 = vpop.permute.xlu0 %1713
      %1715 = vrot.lane.b32.xlu0 %v1670, 100
      %v1716 = vpop.permute.xlu0 %1715
      %1717 = vrot.lane.b32.xlu0 %v1671, 100
      %v1718 = vpop.permute.xlu0 %1717
      %1719 = vrot.lane.b32.xlu0 %v1672, 100
      %v1720 = vpop.permute.xlu0 %1719
      %v1737 = vadd.f32 %v1641, %v1690
      %v1738 = vadd.f32 %v1642, %v1692
      %v1739 = vadd.f32 %v1643, %v1694
      %v1740 = vadd.f32 %v1644, %v1696
      %v1741 = vadd.f32 %v1645, %v1698
      %v1742 = vadd.f32 %v1646, %v1700
      %v1743 = vadd.f32 %v1647, %v1702
      %v1744 = vadd.f32 %v1648, %v1704
      %v1745 = vadd.f32 %v1649, %v1706
      %v1746 = vadd.f32 %v1650, %v1708
      %v1747 = vadd.f32 %v1651, %v1710
      %v1748 = vadd.f32 %v1652, %v1712
      %v1749 = vadd.f32 %v1653, %v1714
      %v1750 = vadd.f32 %v1654, %v1716
      %v1751 = vadd.f32 %v1655, %v1718
      %v1752 = vadd.f32 %v1656, %v1720
      %v1753 = vld [vmem:[%s1560 + $0x2] sm:$0xff]
      %v1754 = vld [vmem:[%s1560 + $0xa] sm:$0xff]
      %v1755 = vld [vmem:[%s1560 + $0x1a] sm:$0xff]
      %v1756 = vld [vmem:[%s1560 + $0x22] sm:$0xff]
      %v1757 = vld [vmem:[%s1560 + $0x32] sm:$0xff]
      %v1758 = vld [vmem:[%s1560 + $0x3a] sm:$0xff]
      %v1759 = vld [vmem:[%s1560 + $0x4a] sm:$0xff]
      %v1760 = vld [vmem:[%s1560 + $0x52] sm:$0xff]
      %v1761 = vld [vmem:[%s1560 + $0x62] sm:$0xff]
      %v1762 = vld [vmem:[%s1560 + $0x6a] sm:$0xff]
      %v1763 = vld [vmem:[%s1560 + $0x7a] sm:$0xff]
      %v1764 = vld [vmem:[%s1560 + $0x82] sm:$0xff]
      %v1765 = vld [vmem:[%s1560 + $0x92] sm:$0xff]
      %v1766 = vld [vmem:[%s1560 + $0x9a] sm:$0xff]
      %v1767 = vld [vmem:[%s1560 + $0xaa] sm:$0xff]
      %v1768 = vld [vmem:[%s1560 + $0xb2] sm:$0xff]
      %1785 = vrot.lane.b32.xlu0 %v1753, 96
      %v1786 = vpop.permute.xlu0 %1785
      %1787 = vrot.lane.b32.xlu0 %v1754, 96
      %v1788 = vpop.permute.xlu0 %1787
      %1789 = vrot.lane.b32.xlu0 %v1755, 96
      %v1790 = vpop.permute.xlu0 %1789
      %1791 = vrot.lane.b32.xlu0 %v1756, 96
      %v1792 = vpop.permute.xlu0 %1791
      %1793 = vrot.lane.b32.xlu0 %v1757, 96
      %v1794 = vpop.permute.xlu0 %1793
      %1795 = vrot.lane.b32.xlu0 %v1758, 96
      %v1796 = vpop.permute.xlu0 %1795
      %1797 = vrot.lane.b32.xlu0 %v1759, 96
      %v1798 = vpop.permute.xlu0 %1797
      %1799 = vrot.lane.b32.xlu0 %v1760, 96
      %v1800 = vpop.permute.xlu0 %1799
      %1801 = vrot.lane.b32.xlu0 %v1761, 96
      %v1802 = vpop.permute.xlu0 %1801
      %1803 = vrot.lane.b32.xlu0 %v1762, 96
      %v1804 = vpop.permute.xlu0 %1803
      %1805 = vrot.lane.b32.xlu0 %v1763, 96
      %v1806 = vpop.permute.xlu0 %1805
      %1807 = vrot.lane.b32.xlu0 %v1764, 96
      %v1808 = vpop.permute.xlu0 %1807
      %1809 = vrot.lane.b32.xlu0 %v1765, 96
      %v1810 = vpop.permute.xlu0 %1809
      %1811 = vrot.lane.b32.xlu0 %v1766, 96
      %v1812 = vpop.permute.xlu0 %1811
      %1813 = vrot.lane.b32.xlu0 %v1767, 96
      %v1814 = vpop.permute.xlu0 %1813
      %1815 = vrot.lane.b32.xlu0 %v1768, 96
      %v1816 = vpop.permute.xlu0 %1815
      %v1833 = vadd.f32 %v1737, %v1786
      %v1834 = vadd.f32 %v1738, %v1788
      %v1835 = vadd.f32 %v1739, %v1790
      %v1836 = vadd.f32 %v1740, %v1792
      %v1837 = vadd.f32 %v1741, %v1794
      %v1838 = vadd.f32 %v1742, %v1796
      %v1839 = vadd.f32 %v1743, %v1798
      %v1840 = vadd.f32 %v1744, %v1800
      %v1841 = vadd.f32 %v1745, %v1802
      %v1842 = vadd.f32 %v1746, %v1804
      %v1843 = vadd.f32 %v1747, %v1806
      %v1844 = vadd.f32 %v1748, %v1808
      %v1845 = vadd.f32 %v1749, %v1810
      %v1846 = vadd.f32 %v1750, %v1812
      %v1847 = vadd.f32 %v1751, %v1814
      %v1848 = vadd.f32 %v1752, %v1816
      %v1849 = vld [vmem:[%s7] sm:$0x1]
      %v1851 = vperm.slane %v1849, 0
      %v1853 = vadd.f32 %v1833, %v1851
      %v1854 = vadd.f32 %v1834, %v1851
      %v1855 = vadd.f32 %v1835, %v1851
      %v1856 = vadd.f32 %v1836, %v1851
      %v1857 = vadd.f32 %v1837, %v1851
      %v1858 = vadd.f32 %v1838, %v1851
      %v1859 = vadd.f32 %v1839, %v1851
      %v1860 = vadd.f32 %v1840, %v1851
      %v1861 = vadd.f32 %v1841, %v1851
      %v1862 = vadd.f32 %v1842, %v1851
      %v1863 = vadd.f32 %v1843, %v1851
      %v1864 = vadd.f32 %v1844, %v1851
      %v1865 = vadd.f32 %v1845, %v1851
      %v1866 = vadd.f32 %v1846, %v1851
      %v1867 = vadd.f32 %v1847, %v1851
      %v1868 = vadd.f32 %v1848, %v1851
      %v1869 = vld [vmem:[%s8] sm:$0x1]
      %v1871 = vperm.slane %v1869, 0
      %v1873 = vmul.f32 %v1853, %v1871
      %v1874 = vmul.f32 %v1854, %v1871
      %v1875 = vmul.f32 %v1855, %v1871
      %v1876 = vmul.f32 %v1856, %v1871
      %v1877 = vmul.f32 %v1857, %v1871
      %v1878 = vmul.f32 %v1858, %v1871
      %v1879 = vmul.f32 %v1859, %v1871
      %v1880 = vmul.f32 %v1860, %v1871
      %v1881 = vmul.f32 %v1861, %v1871
      %v1882 = vmul.f32 %v1862, %v1871
      %v1883 = vmul.f32 %v1863, %v1871
      %v1884 = vmul.f32 %v1864, %v1871
      %v1885 = vmul.f32 %v1865, %v1871
      %v1886 = vmul.f32 %v1866, %v1871
      %v1887 = vmul.f32 %v1867, %v1871
      %v1888 = vmul.f32 %v1868, %v1871
      %v1889 = vadd.f32 %v1873, 2.0
      %v1890 = vadd.f32 %v1874, 2.0
      %v1891 = vadd.f32 %v1875, 2.0
      %v1892 = vadd.f32 %v1876, 2.0
      %v1893 = vadd.f32 %v1877, 2.0
      %v1894 = vadd.f32 %v1878, 2.0
      %v1895 = vadd.f32 %v1879, 2.0
      %v1896 = vadd.f32 %v1880, 2.0
      %v1897 = vadd.f32 %v1881, 2.0
      %v1898 = vadd.f32 %v1882, 2.0
      %v1899 = vadd.f32 %v1883, 2.0
      %v1900 = vadd.f32 %v1884, 2.0
      %v1901 = vadd.f32 %v1885, 2.0
      %v1902 = vadd.f32 %v1886, 2.0
      %v1903 = vadd.f32 %v1887, 2.0
      %v1904 = vadd.f32 %v1888, 2.0
      %v1905 = vand.u32 2147483647, %v1889
      %v1906 = vand.u32 2147483647, %v1890
      %v1907 = vand.u32 2147483647, %v1891
      %v1908 = vand.u32 2147483647, %v1892
      %v1909 = vand.u32 2147483647, %v1893
      %v1910 = vand.u32 2147483647, %v1894
      %v1911 = vand.u32 2147483647, %v1895
      %v1912 = vand.u32 2147483647, %v1896
      %v1913 = vand.u32 2147483647, %v1897
      %v1914 = vand.u32 2147483647, %v1898
      %v1915 = vand.u32 2147483647, %v1899
      %v1916 = vand.u32 2147483647, %v1900
      %v1917 = vand.u32 2147483647, %v1901
      %v1918 = vand.u32 2147483647, %v1902
      %v1919 = vand.u32 2147483647, %v1903
      %v1920 = vand.u32 2147483647, %v1904
      %v1921 = vsub.f32 0.0, %v1905
      %v1922 = vsub.f32 0.0, %v1906
      %v1923 = vsub.f32 0.0, %v1907
      %v1924 = vsub.f32 0.0, %v1908
      %v1925 = vsub.f32 0.0, %v1909
      %v1926 = vsub.f32 0.0, %v1910
      %v1927 = vsub.f32 0.0, %v1911
      %v1928 = vsub.f32 0.0, %v1912
      %v1929 = vsub.f32 0.0, %v1913
      %v1930 = vsub.f32 0.0, %v1914
      %v1931 = vsub.f32 0.0, %v1915
      %v1932 = vsub.f32 0.0, %v1916
      %v1933 = vsub.f32 0.0, %v1917
      %v1934 = vsub.f32 0.0, %v1918
      %v1935 = vsub.f32 0.0, %v1919
      %v1936 = vsub.f32 0.0, %v1920
      %v1937 = vmul.f32 %v1921, 1.442695
      %v1938 = vpow.pop %v1937
      %v1939 = vmul.f32 %v1922, 1.442695
      %v1940 = vpow.pop %v1939
      %v1941 = vmul.f32 %v1923, 1.442695
      %v1942 = vpow.pop %v1941
      %v1943 = vmul.f32 %v1924, 1.442695
      %v1944 = vpow.pop %v1943
      %v1945 = vmul.f32 %v1925, 1.442695
      %v1946 = vpow.pop %v1945
      %v1947 = vmul.f32 %v1926, 1.442695
      %v1948 = vpow.pop %v1947
      %v1949 = vmul.f32 %v1927, 1.442695
      %v1950 = vpow.pop %v1949
      %v1951 = vmul.f32 %v1928, 1.442695
      %v1952 = vpow.pop %v1951
      %v1953 = vmul.f32 %v1929, 1.442695
      %v1954 = vpow.pop %v1953
      %v1955 = vmul.f32 %v1930, 1.442695
      %v1956 = vpow.pop %v1955
      %v1957 = vmul.f32 %v1931, 1.442695
      %v1958 = vpow.pop %v1957
      %v1959 = vmul.f32 %v1932, 1.442695
      %v1960 = vpow.pop %v1959
      %v1961 = vmul.f32 %v1933, 1.442695
      %v1962 = vpow.pop %v1961
      %v1963 = vmul.f32 %v1934, 1.442695
      %v1964 = vpow.pop %v1963
      %v1965 = vmul.f32 %v1935, 1.442695
      %v1966 = vpow.pop %v1965
      %v1967 = vmul.f32 %v1936, 1.442695
      %v1968 = vpow.pop %v1967
      %v1969 = vadd.f32 %v1938, 1.0
      %v1970 = vadd.f32 %v1940, 1.0
      %v1971 = vadd.f32 %v1942, 1.0
      %v1972 = vadd.f32 %v1944, 1.0
      %v1973 = vadd.f32 %v1946, 1.0
      %v1974 = vadd.f32 %v1948, 1.0
      %v1975 = vadd.f32 %v1950, 1.0
      %v1976 = vadd.f32 %v1952, 1.0
      %v1977 = vadd.f32 %v1954, 1.0
      %v1978 = vadd.f32 %v1956, 1.0
      %v1979 = vadd.f32 %v1958, 1.0
      %v1980 = vadd.f32 %v1960, 1.0
      %v1981 = vadd.f32 %v1962, 1.0
      %v1982 = vadd.f32 %v1964, 1.0
      %v1983 = vadd.f32 %v1966, 1.0
      %v1984 = vadd.f32 %v1968, 1.0
      %v1985 = vrcp.pop %v1969
      %v1986 = vmul.f32 %v1969, %v1985
      %v1987 = vsub.f32 1.0, %v1986
      %v1988 = vmul.f32 %v1985, %v1987
      %v1989 = vadd.f32 %v1985, %v1988
      %vm1990 = vweird.f32 %v1969
      %vm1991 = vweird.f32 %v1985
      %vm1992 = vmor %vm1990, %vm1991
      %v1993 = vsel %vm1992, %v1985, %v1989
      %v1994 = vand.u32 2147483647, %v1969
      %vm1995 = vcmp.eq.f32.partialorder %v1994, 8.507059e+37
      %v1996 = vand.u32 %v1969, 2147483648
      %v1997 = vor.u32 1.1754944e-38, %v1996
      %v1998 = vsel %vm1995, %v1997, %v1993
      %v1999 = vrcp.pop %v1970
      %v2000 = vmul.f32 %v1970, %v1999
      %v2001 = vsub.f32 1.0, %v2000
      %v2002 = vmul.f32 %v1999, %v2001
      %v2003 = vadd.f32 %v1999, %v2002
      %vm2004 = vweird.f32 %v1970
      %vm2005 = vweird.f32 %v1999
      %vm2006 = vmor %vm2004, %vm2005
      %v2007 = vsel %vm2006, %v1999, %v2003
      %v2008 = vand.u32 2147483647, %v1970
      %vm2009 = vcmp.eq.f32.partialorder %v2008, 8.507059e+37
      %v2010 = vand.u32 %v1970, 2147483648
      %v2011 = vor.u32 1.1754944e-38, %v2010
      %v2012 = vsel %vm2009, %v2011, %v2007
      %v2013 = vrcp.pop %v1971
      %v2014 = vmul.f32 %v1971, %v2013
      %v2015 = vsub.f32 1.0, %v2014
      %v2016 = vmul.f32 %v2013, %v2015
      %v2017 = vadd.f32 %v2013, %v2016
      %vm2018 = vweird.f32 %v1971
      %vm2019 = vweird.f32 %v2013
      %vm2020 = vmor %vm2018, %vm2019
      %v2021 = vsel %vm2020, %v2013, %v2017
      %v2022 = vand.u32 2147483647, %v1971
      %vm2023 = vcmp.eq.f32.partialorder %v2022, 8.507059e+37
      %v2024 = vand.u32 %v1971, 2147483648
      %v2025 = vor.u32 1.1754944e-38, %v2024
      %v2026 = vsel %vm2023, %v2025, %v2021
      %v2027 = vrcp.pop %v1972
      %v2028 = vmul.f32 %v1972, %v2027
      %v2029 = vsub.f32 1.0, %v2028
      %v2030 = vmul.f32 %v2027, %v2029
      %v2031 = vadd.f32 %v2027, %v2030
      %vm2032 = vweird.f32 %v1972
      %vm2033 = vweird.f32 %v2027
      %vm2034 = vmor %vm2032, %vm2033
      %v2035 = vsel %vm2034, %v2027, %v2031
      %v2036 = vand.u32 2147483647, %v1972
      %vm2037 = vcmp.eq.f32.partialorder %v2036, 8.507059e+37
      %v2038 = vand.u32 %v1972, 2147483648
      %v2039 = vor.u32 1.1754944e-38, %v2038
      %v2040 = vsel %vm2037, %v2039, %v2035
      %v2041 = vrcp.pop %v1973
      %v2042 = vmul.f32 %v1973, %v2041
      %v2043 = vsub.f32 1.0, %v2042
      %v2044 = vmul.f32 %v2041, %v2043
      %v2045 = vadd.f32 %v2041, %v2044
      %vm2046 = vweird.f32 %v1973
      %vm2047 = vweird.f32 %v2041
      %vm2048 = vmor %vm2046, %vm2047
      %v2049 = vsel %vm2048, %v2041, %v2045
      %v2050 = vand.u32 2147483647, %v1973
      %vm2051 = vcmp.eq.f32.partialorder %v2050, 8.507059e+37
      %v2052 = vand.u32 %v1973, 2147483648
      %v2053 = vor.u32 1.1754944e-38, %v2052
      %v2054 = vsel %vm2051, %v2053, %v2049
      %v2055 = vrcp.pop %v1974
      %v2056 = vmul.f32 %v1974, %v2055
      %v2057 = vsub.f32 1.0, %v2056
      %v2058 = vmul.f32 %v2055, %v2057
      %v2059 = vadd.f32 %v2055, %v2058
      %vm2060 = vweird.f32 %v1974
      %vm2061 = vweird.f32 %v2055
      %vm2062 = vmor %vm2060, %vm2061
      %v2063 = vsel %vm2062, %v2055, %v2059
      %v2064 = vand.u32 2147483647, %v1974
      %vm2065 = vcmp.eq.f32.partialorder %v2064, 8.507059e+37
      %v2066 = vand.u32 %v1974, 2147483648
      %v2067 = vor.u32 1.1754944e-38, %v2066
      %v2068 = vsel %vm2065, %v2067, %v2063
      %v2069 = vrcp.pop %v1975
      %v2070 = vmul.f32 %v1975, %v2069
      %v2071 = vsub.f32 1.0, %v2070
      %v2072 = vmul.f32 %v2069, %v2071
      %v2073 = vadd.f32 %v2069, %v2072
      %vm2074 = vweird.f32 %v1975
      %vm2075 = vweird.f32 %v2069
      %vm2076 = vmor %vm2074, %vm2075
      %v2077 = vsel %vm2076, %v2069, %v2073
      %v2078 = vand.u32 2147483647, %v1975
      %vm2079 = vcmp.eq.f32.partialorder %v2078, 8.507059e+37
      %v2080 = vand.u32 %v1975, 2147483648
      %v2081 = vor.u32 1.1754944e-38, %v2080
      %v2082 = vsel %vm2079, %v2081, %v2077
      %v2083 = vrcp.pop %v1976
      %v2084 = vmul.f32 %v1976, %v2083
      %v2085 = vsub.f32 1.0, %v2084
      %v2086 = vmul.f32 %v2083, %v2085
      %v2087 = vadd.f32 %v2083, %v2086
      %vm2088 = vweird.f32 %v1976
      %vm2089 = vweird.f32 %v2083
      %vm2090 = vmor %vm2088, %vm2089
      %v2091 = vsel %vm2090, %v2083, %v2087
      %v2092 = vand.u32 2147483647, %v1976
      %vm2093 = vcmp.eq.f32.partialorder %v2092, 8.507059e+37
      %v2094 = vand.u32 %v1976, 2147483648
      %v2095 = vor.u32 1.1754944e-38, %v2094
      %v2096 = vsel %vm2093, %v2095, %v2091
      %v2097 = vrcp.pop %v1977
      %v2098 = vmul.f32 %v1977, %v2097
      %v2099 = vsub.f32 1.0, %v2098
      %v2100 = vmul.f32 %v2097, %v2099
      %v2101 = vadd.f32 %v2097, %v2100
      %vm2102 = vweird.f32 %v1977
      %vm2103 = vweird.f32 %v2097
      %vm2104 = vmor %vm2102, %vm2103
      %v2105 = vsel %vm2104, %v2097, %v2101
      %v2106 = vand.u32 2147483647, %v1977
      %vm2107 = vcmp.eq.f32.partialorder %v2106, 8.507059e+37
      %v2108 = vand.u32 %v1977, 2147483648
      %v2109 = vor.u32 1.1754944e-38, %v2108
      %v2110 = vsel %vm2107, %v2109, %v2105
      %v2111 = vrcp.pop %v1978
      %v2112 = vmul.f32 %v1978, %v2111
      %v2113 = vsub.f32 1.0, %v2112
      %v2114 = vmul.f32 %v2111, %v2113
      %v2115 = vadd.f32 %v2111, %v2114
      %vm2116 = vweird.f32 %v1978
      %vm2117 = vweird.f32 %v2111
      %vm2118 = vmor %vm2116, %vm2117
      %v2119 = vsel %vm2118, %v2111, %v2115
      %v2120 = vand.u32 2147483647, %v1978
      %vm2121 = vcmp.eq.f32.partialorder %v2120, 8.507059e+37
      %v2122 = vand.u32 %v1978, 2147483648
      %v2123 = vor.u32 1.1754944e-38, %v2122
      %v2124 = vsel %vm2121, %v2123, %v2119
      %v2125 = vrcp.pop %v1979
      %v2126 = vmul.f32 %v1979, %v2125
      %v2127 = vsub.f32 1.0, %v2126
      %v2128 = vmul.f32 %v2125, %v2127
      %v2129 = vadd.f32 %v2125, %v2128
      %vm2130 = vweird.f32 %v1979
      %vm2131 = vweird.f32 %v2125
      %vm2132 = vmor %vm2130, %vm2131
      %v2133 = vsel %vm2132, %v2125, %v2129
      %v2134 = vand.u32 2147483647, %v1979
      %vm2135 = vcmp.eq.f32.partialorder %v2134, 8.507059e+37
      %v2136 = vand.u32 %v1979, 2147483648
      %v2137 = vor.u32 1.1754944e-38, %v2136
      %v2138 = vsel %vm2135, %v2137, %v2133
      %v2139 = vrcp.pop %v1980
      %v2140 = vmul.f32 %v1980, %v2139
      %v2141 = vsub.f32 1.0, %v2140
      %v2142 = vmul.f32 %v2139, %v2141
      %v2143 = vadd.f32 %v2139, %v2142
      %vm2144 = vweird.f32 %v1980
      %vm2145 = vweird.f32 %v2139
      %vm2146 = vmor %vm2144, %vm2145
      %v2147 = vsel %vm2146, %v2139, %v2143
      %v2148 = vand.u32 2147483647, %v1980
      %vm2149 = vcmp.eq.f32.partialorder %v2148, 8.507059e+37
      %v2150 = vand.u32 %v1980, 2147483648
      %v2151 = vor.u32 1.1754944e-38, %v2150
      %v2152 = vsel %vm2149, %v2151, %v2147
      %v2153 = vrcp.pop %v1981
      %v2154 = vmul.f32 %v1981, %v2153
      %v2155 = vsub.f32 1.0, %v2154
      %v2156 = vmul.f32 %v2153, %v2155
      %v2157 = vadd.f32 %v2153, %v2156
      %vm2158 = vweird.f32 %v1981
      %vm2159 = vweird.f32 %v2153
      %vm2160 = vmor %vm2158, %vm2159
      %v2161 = vsel %vm2160, %v2153, %v2157
      %v2162 = vand.u32 2147483647, %v1981
      %vm2163 = vcmp.eq.f32.partialorder %v2162, 8.507059e+37
      %v2164 = vand.u32 %v1981, 2147483648
      %v2165 = vor.u32 1.1754944e-38, %v2164
      %v2166 = vsel %vm2163, %v2165, %v2161
      %v2167 = vrcp.pop %v1982
      %v2168 = vmul.f32 %v1982, %v2167
      %v2169 = vsub.f32 1.0, %v2168
      %v2170 = vmul.f32 %v2167, %v2169
      %v2171 = vadd.f32 %v2167, %v2170
      %vm2172 = vweird.f32 %v1982
      %vm2173 = vweird.f32 %v2167
      %vm2174 = vmor %vm2172, %vm2173
      %v2175 = vsel %vm2174, %v2167, %v2171
      %v2176 = vand.u32 2147483647, %v1982
      %vm2177 = vcmp.eq.f32.partialorder %v2176, 8.507059e+37
      %v2178 = vand.u32 %v1982, 2147483648
      %v2179 = vor.u32 1.1754944e-38, %v2178
      %v2180 = vsel %vm2177, %v2179, %v2175
      %v2181 = vrcp.pop %v1983
      %v2182 = vmul.f32 %v1983, %v2181
      %v2183 = vsub.f32 1.0, %v2182
      %v2184 = vmul.f32 %v2181, %v2183
      %v2185 = vadd.f32 %v2181, %v2184
      %vm2186 = vweird.f32 %v1983
      %vm2187 = vweird.f32 %v2181
      %vm2188 = vmor %vm2186, %vm2187
      %v2189 = vsel %vm2188, %v2181, %v2185
      %v2190 = vand.u32 2147483647, %v1983
      %vm2191 = vcmp.eq.f32.partialorder %v2190, 8.507059e+37
      %v2192 = vand.u32 %v1983, 2147483648
      %v2193 = vor.u32 1.1754944e-38, %v2192
      %v2194 = vsel %vm2191, %v2193, %v2189
      %v2195 = vrcp.pop %v1984
      %v2196 = vmul.f32 %v1984, %v2195
      %v2197 = vsub.f32 1.0, %v2196
      %v2198 = vmul.f32 %v2195, %v2197
      %v2199 = vadd.f32 %v2195, %v2198
      %vm2200 = vweird.f32 %v1984
      %vm2201 = vweird.f32 %v2195
      %vm2202 = vmor %vm2200, %vm2201
      %v2203 = vsel %vm2202, %v2195, %v2199
      %v2204 = vand.u32 2147483647, %v1984
      %vm2205 = vcmp.eq.f32.partialorder %v2204, 8.507059e+37
      %v2206 = vand.u32 %v1984, 2147483648
      %v2207 = vor.u32 1.1754944e-38, %v2206
      %v2208 = vsel %vm2205, %v2207, %v2203
      %vm2209 = vcmp.ge.f32.partialorder %v1889, 0.0
      %vm2210 = vcmp.ge.f32.partialorder %v1890, 0.0
      %vm2211 = vcmp.ge.f32.partialorder %v1891, 0.0
      %vm2212 = vcmp.ge.f32.partialorder %v1892, 0.0
      %vm2213 = vcmp.ge.f32.partialorder %v1893, 0.0
      %vm2214 = vcmp.ge.f32.partialorder %v1894, 0.0
      %vm2215 = vcmp.ge.f32.partialorder %v1895, 0.0
      %vm2216 = vcmp.ge.f32.partialorder %v1896, 0.0
      %vm2217 = vcmp.ge.f32.partialorder %v1897, 0.0
      %vm2218 = vcmp.ge.f32.partialorder %v1898, 0.0
      %vm2219 = vcmp.ge.f32.partialorder %v1899, 0.0
      %vm2220 = vcmp.ge.f32.partialorder %v1900, 0.0
      %vm2221 = vcmp.ge.f32.partialorder %v1901, 0.0
      %vm2222 = vcmp.ge.f32.partialorder %v1902, 0.0
      %vm2223 = vcmp.ge.f32.partialorder %v1903, 0.0
      %vm2224 = vcmp.ge.f32.partialorder %v1904, 0.0
      %v2225 = vmul.f32 %v1938, %v1998
      %v2226 = vmul.f32 %v1940, %v2012
      %v2227 = vmul.f32 %v1942, %v2026
      %v2228 = vmul.f32 %v1944, %v2040
      %v2229 = vmul.f32 %v1946, %v2054
      %v2230 = vmul.f32 %v1948, %v2068
      %v2231 = vmul.f32 %v1950, %v2082
      %v2232 = vmul.f32 %v1952, %v2096
      %v2233 = vmul.f32 %v1954, %v2110
      %v2234 = vmul.f32 %v1956, %v2124
      %v2235 = vmul.f32 %v1958, %v2138
      %v2236 = vmul.f32 %v1960, %v2152
      %v2237 = vmul.f32 %v1962, %v2166
      %v2238 = vmul.f32 %v1964, %v2180
      %v2239 = vmul.f32 %v1966, %v2194
      %v2240 = vmul.f32 %v1968, %v2208
      %v2241 = vsel %vm2209, %v1998, %v2225
      %v2242 = vsel %vm2210, %v2012, %v2226
      %v2243 = vsel %vm2211, %v2026, %v2227
      %v2244 = vsel %vm2212, %v2040, %v2228
      %v2245 = vsel %vm2213, %v2054, %v2229
      %v2246 = vsel %vm2214, %v2068, %v2230
      %v2247 = vsel %vm2215, %v2082, %v2231
      %v2248 = vsel %vm2216, %v2096, %v2232
      %v2249 = vsel %vm2217, %v2110, %v2233
      %v2250 = vsel %vm2218, %v2124, %v2234
      %v2251 = vsel %vm2219, %v2138, %v2235
      %v2252 = vsel %vm2220, %v2152, %v2236
      %v2253 = vsel %vm2221, %v2166, %v2237
      %v2254 = vsel %vm2222, %v2180, %v2238
      %v2255 = vsel %vm2223, %v2194, %v2239
      %v2256 = vsel %vm2224, %v2208, %v2240
      %v2257 = vmin.f32 %v1889, 0.0
      %v2258 = vmin.f32 %v1890, 0.0
      %v2259 = vmin.f32 %v1891, 0.0
      %v2260 = vmin.f32 %v1892, 0.0
      %v2261 = vmin.f32 %v1893, 0.0
      %v2262 = vmin.f32 %v1894, 0.0
      %v2263 = vmin.f32 %v1895, 0.0
      %v2264 = vmin.f32 %v1896, 0.0
      %v2265 = vmin.f32 %v1897, 0.0
      %v2266 = vmin.f32 %v1898, 0.0
      %v2267 = vmin.f32 %v1899, 0.0
      %v2268 = vmin.f32 %v1900, 0.0
      %v2269 = vmin.f32 %v1901, 0.0
      %v2270 = vmin.f32 %v1902, 0.0
      %v2271 = vmin.f32 %v1903, 0.0
      %v2272 = vmin.f32 %v1904, 0.0
      %v2273 = vlog2.pop %v1969
      %v2274 = vmul.f32 %v2273, 0.6931472
      %v2275 = vlog2.pop %v1970
      %v2276 = vmul.f32 %v2275, 0.6931472
      %v2277 = vlog2.pop %v1971
      %v2278 = vmul.f32 %v2277, 0.6931472
      %v2279 = vlog2.pop %v1972
      %v2280 = vmul.f32 %v2279, 0.6931472
      %v2281 = vlog2.pop %v1973
      %v2282 = vmul.f32 %v2281, 0.6931472
      %v2283 = vlog2.pop %v1974
      %v2284 = vmul.f32 %v2283, 0.6931472
      %v2285 = vlog2.pop %v1975
      %v2286 = vmul.f32 %v2285, 0.6931472
      %v2287 = vlog2.pop %v1976
      %v2288 = vmul.f32 %v2287, 0.6931472
      %v2289 = vlog2.pop %v1977
      %v2290 = vmul.f32 %v2289, 0.6931472
      %v2291 = vlog2.pop %v1978
      %v2292 = vmul.f32 %v2291, 0.6931472
      %v2293 = vlog2.pop %v1979
      %v2294 = vmul.f32 %v2293, 0.6931472
      %v2295 = vlog2.pop %v1980
      %v2296 = vmul.f32 %v2295, 0.6931472
      %v2297 = vlog2.pop %v1981
      %v2298 = vmul.f32 %v2297, 0.6931472
      %v2299 = vlog2.pop %v1982
      %v2300 = vmul.f32 %v2299, 0.6931472
      %v2301 = vlog2.pop %v1983
      %v2302 = vmul.f32 %v2301, 0.6931472
      %v2303 = vlog2.pop %v1984
      %v2304 = vmul.f32 %v2303, 0.6931472
      %v2305 = vsub.f32 %v2257, %v2274
      %v2306 = vsub.f32 %v2258, %v2276
      %v2307 = vsub.f32 %v2259, %v2278
      %v2308 = vsub.f32 %v2260, %v2280
      %v2309 = vsub.f32 %v2261, %v2282
      %v2310 = vsub.f32 %v2262, %v2284
      %v2311 = vsub.f32 %v2263, %v2286
      %v2312 = vsub.f32 %v2264, %v2288
      %v2313 = vsub.f32 %v2265, %v2290
      %v2314 = vsub.f32 %v2266, %v2292
      %v2315 = vsub.f32 %v2267, %v2294
      %v2316 = vsub.f32 %v2268, %v2296
      %v2317 = vsub.f32 %v2269, %v2298
      %v2318 = vsub.f32 %v2270, %v2300
      %v2319 = vsub.f32 %v2271, %v2302
      %v2320 = vsub.f32 %v2272, %v2304
      %v2321 = vld [vmem:[%s466] sm:$0xff]
      %v2322 = vld [vmem:[%s466 + $0x8] sm:$0xff]
      %v2323 = vld [vmem:[%s466 + $0x10] sm:$0xff]
      %v2324 = vld [vmem:[%s466 + $0x18] sm:$0xff]
      %v2325 = vld [vmem:[%s466 + $0x20] sm:$0xff]
      %v2326 = vld [vmem:[%s466 + $0x28] sm:$0xff]
      %v2327 = vld [vmem:[%s466 + $0x30] sm:$0xff]
      %v2328 = vld [vmem:[%s466 + $0x38] sm:$0xff]
      %v2329 = vld [vmem:[%s466 + $0x40] sm:$0xff]
      %v2330 = vld [vmem:[%s466 + $0x48] sm:$0xff]
      %v2331 = vld [vmem:[%s466 + $0x50] sm:$0xff]
      %v2332 = vld [vmem:[%s466 + $0x58] sm:$0xff]
      %v2333 = vld [vmem:[%s466 + $0x60] sm:$0xff]
      %v2334 = vld [vmem:[%s466 + $0x68] sm:$0xff]
      %v2335 = vld [vmem:[%s466 + $0x70] sm:$0xff]
      %v2336 = vld [vmem:[%s466 + $0x78] sm:$0xff]
      %2353 = vrot.lane.b32.xlu0 %v1873, 126
      %v2354 = vpop.permute.xlu0 %2353
      %2355 = vrot.lane.b32.xlu0 %v1874, 126
      %v2356 = vpop.permute.xlu0 %2355
      %2357 = vrot.lane.b32.xlu0 %v1875, 126
      %v2358 = vpop.permute.xlu0 %2357
      %2359 = vrot.lane.b32.xlu0 %v1876, 126
      %v2360 = vpop.permute.xlu0 %2359
      %2361 = vrot.lane.b32.xlu0 %v1877, 126
      %v2362 = vpop.permute.xlu0 %2361
      %2363 = vrot.lane.b32.xlu0 %v1878, 126
      %v2364 = vpop.permute.xlu0 %2363
      %2365 = vrot.lane.b32.xlu0 %v1879, 126
      %v2366 = vpop.permute.xlu0 %2365
      %2367 = vrot.lane.b32.xlu0 %v1880, 126
      %v2368 = vpop.permute.xlu0 %2367
      %2369 = vrot.lane.b32.xlu0 %v1881, 126
      %v2370 = vpop.permute.xlu0 %2369
      %2371 = vrot.lane.b32.xlu0 %v1882, 126
      %v2372 = vpop.permute.xlu0 %2371
      %2373 = vrot.lane.b32.xlu0 %v1883, 126
      %v2374 = vpop.permute.xlu0 %2373
      %2375 = vrot.lane.b32.xlu0 %v1884, 126
      %v2376 = vpop.permute.xlu0 %2375
      %2377 = vrot.lane.b32.xlu0 %v1885, 126
      %v2378 = vpop.permute.xlu0 %2377
      %2379 = vrot.lane.b32.xlu0 %v1886, 126
      %v2380 = vpop.permute.xlu0 %2379
      %2381 = vrot.lane.b32.xlu0 %v1887, 126
      %v2382 = vpop.permute.xlu0 %2381
      %2383 = vrot.lane.b32.xlu0 %v1888, 126
      %v2384 = vpop.permute.xlu0 %2383
      %v2401 = vadd.f32 %v2321, %v2354
      %v2402 = vadd.f32 %v2322, %v2356
      %v2403 = vadd.f32 %v2323, %v2358
      %v2404 = vadd.f32 %v2324, %v2360
      %v2405 = vadd.f32 %v2325, %v2362
      %v2406 = vadd.f32 %v2326, %v2364
      %v2407 = vadd.f32 %v2327, %v2366
      %v2408 = vadd.f32 %v2328, %v2368
      %v2409 = vadd.f32 %v2329, %v2370
      %v2410 = vadd.f32 %v2330, %v2372
      %v2411 = vadd.f32 %v2331, %v2374
      %v2412 = vadd.f32 %v2332, %v2376
      %v2413 = vadd.f32 %v2333, %v2378
      %v2414 = vadd.f32 %v2334, %v2380
      %v2415 = vadd.f32 %v2335, %v2382
      %v2416 = vadd.f32 %v2336, %v2384
      %v2417 = vmul.f32 %v2401, %v2241
      %v2418 = vmul.f32 %v2402, %v2242
      %v2419 = vmul.f32 %v2403, %v2243
      %v2420 = vmul.f32 %v2404, %v2244
      %v2421 = vmul.f32 %v2405, %v2245
      %v2422 = vmul.f32 %v2406, %v2246
      %v2423 = vmul.f32 %v2407, %v2247
      %v2424 = vmul.f32 %v2408, %v2248
      %v2425 = vmul.f32 %v2409, %v2249
      %v2426 = vmul.f32 %v2410, %v2250
      %v2427 = vmul.f32 %v2411, %v2251
      %v2428 = vmul.f32 %v2412, %v2252
      %v2429 = vmul.f32 %v2413, %v2253
      %v2430 = vmul.f32 %v2414, %v2254
      %v2431 = vmul.f32 %v2415, %v2255
      %v2432 = vmul.f32 %v2416, %v2256
      %vm2433 = vcmask 15360
      %2434 = vst.msk [vmem:[%s477] sm:$0xff] %vm2433, %v2417
      %2435 = vst.msk [vmem:[%s477 + $0x8] sm:$0xff] %vm2433, %v2418
      %2436 = vst.msk [vmem:[%s477 + $0x10] sm:$0xff] %vm2433, %v2419
      %2437 = vst.msk [vmem:[%s477 + $0x18] sm:$0xff] %vm2433, %v2420
      %2438 = vst.msk [vmem:[%s477 + $0x20] sm:$0xff] %vm2433, %v2421
      %2439 = vst.msk [vmem:[%s477 + $0x28] sm:$0xff] %vm2433, %v2422
      %2440 = vst.msk [vmem:[%s477 + $0x30] sm:$0xff] %vm2433, %v2423
      %2441 = vst.msk [vmem:[%s477 + $0x38] sm:$0xff] %vm2433, %v2424
      %2442 = vst.msk [vmem:[%s477 + $0x40] sm:$0xff] %vm2433, %v2425
      %2443 = vst.msk [vmem:[%s477 + $0x48] sm:$0xff] %vm2433, %v2426
      %2444 = vst.msk [vmem:[%s477 + $0x50] sm:$0xff] %vm2433, %v2427
      %2445 = vst.msk [vmem:[%s477 + $0x58] sm:$0xff] %vm2433, %v2428
      %2446 = vst.msk [vmem:[%s477 + $0x60] sm:$0xff] %vm2433, %v2429
      %2447 = vst.msk [vmem:[%s477 + $0x68] sm:$0xff] %vm2433, %v2430
      %2448 = vst.msk [vmem:[%s477 + $0x70] sm:$0xff] %vm2433, %v2431
      %2449 = vst.msk [vmem:[%s477 + $0x78] sm:$0xff] %vm2433, %v2432
      %v2450 = vsel %vm2433, %v2305, 0.0
      %v2451 = vsel %vm2433, %v2307, 0.0
      %v2452 = vadd.f32 %v2450, %v2451
      %v2453 = vsel %vm2433, %v2309, 0.0
      %v2454 = vadd.f32 %v2452, %v2453
      %v2455 = vsel %vm2433, %v2311, 0.0
      %v2456 = vadd.f32 %v2454, %v2455
      %v2457 = vsel %vm2433, %v2313, 0.0
      %v2458 = vadd.f32 %v2456, %v2457
      %v2459 = vsel %vm2433, %v2315, 0.0
      %v2460 = vadd.f32 %v2458, %v2459
      %v2461 = vsel %vm2433, %v2317, 0.0
      %v2462 = vadd.f32 %v2460, %v2461
      %v2463 = vsel %vm2433, %v2319, 0.0
      %v2464 = vadd.f32 %v2462, %v2463
      %v2465 = vsel %vm2433, %v2306, 0.0
      %v2466 = vsel %vm2433, %v2308, 0.0
      %v2467 = vadd.f32 %v2465, %v2466
      %v2468 = vsel %vm2433, %v2310, 0.0
      %v2469 = vadd.f32 %v2467, %v2468
      %v2470 = vsel %vm2433, %v2312, 0.0
      %v2471 = vadd.f32 %v2469, %v2470
      %v2472 = vsel %vm2433, %v2314, 0.0
      %v2473 = vadd.f32 %v2471, %v2472
      %v2474 = vsel %vm2433, %v2316, 0.0
      %v2475 = vadd.f32 %v2473, %v2474
      %v2476 = vsel %vm2433, %v2318, 0.0
      %v2477 = vadd.f32 %v2475, %v2476
      %v2478 = vsel %vm2433, %v2320, 0.0
      %v2479 = vadd.f32 %v2477, %v2478
      %2480 = vst.msk [vmem:[%s487] sm:$0xff] %vm2433, %v2464
      %2481 = vst.msk [vmem:[%s487 + $0x8] sm:$0xff] %vm2433, %v2479
      %s2482 = smul.u32 8, %s28
      %p2483 = scmp.lt.s32.totalorder %s27, 1
      %s2484 = scalar_select %p2483, %s27, 1
      %p2485 = scmp.lt.s32.totalorder %s2482, 15
      %s2486 = scalar_select %p2485, %s2482, 15
      %s2487 = smul.addr %s2486, 2
      %s2488 = smul.addr %s2484, 32
      %s2489 = sadd.s32 %s2487, %s2488
      %s2490 = smul.addr %s2489, 8
      %s2491 = scalar_lea.vmem %s10, %s2490
      %p2492 = scmp.lt.s32.totalorder %s27, 1
      %s2493 = scalar_select %p2492, %s27, 1
      %p2494 = scmp.lt.s32.totalorder %s28, 1
      %s2495 = scalar_select %p2494, %s28, 1
      %s2496 = smul.addr %s2495, 2
      %s2497 = smul.addr %s2493, 4
      %s2498 = sadd.s32 %s2496, %s2497
      %s2499 = smul.addr %s2498, 8
      %s2500 = scalar_lea.vmem %s11, %s2499
      // Predicated region
      $region69: #{affine_coupling_forward.1} parent=59 // pred_check
        %p2501 = pneg %p279
      $region70: #{affine_coupling_forward.1} parent=59 // pred_check_branch
        %2503 = sbr.rel (%p2501) target = $region72
      $region71: #{affine_coupling_forward.1} parent=59 // pred_region
        %s2504 = smul.u32 8, %s28
      $region72: #{affine_coupling_forward.1} parent=59 // pred_fallthru
        _
      // Predicated region
      $region73: #{affine_coupling_forward.1} parent=59 // pred_check
        %p2505 = pneg %p307
      $region74: #{affine_coupling_forward.1} parent=59 // pred_check_branch
        %2507 = sbr.rel (%p2505) target = $region76
      $region75: #{affine_coupling_forward.1} parent=59 // pred_region
        _
      $region76: #{affine_coupling_forward.1} parent=59 // pred_fallthru
        _
    $region60: #{affine_coupling_forward.1} parent=5 // pred_fallthru
      _
    %p2508 = scmp.le.s32.totalorder 2, %s18
    // Predicated region
    $region77: #{affine_coupling_forward.1} parent=5 // pred_check
      %p2509 = pneg %p2508
    $region78: #{affine_coupling_forward.1} parent=5 // pred_check_branch
      %2511 = sbr.rel (%p2509) target = $region80
    $region79: #{affine_coupling_forward.1} parent=5 // pred_region
      %s2512 = ssub.s32 %s18, 2
      // Predicated region
      $region81: #{affine_coupling_forward.1} parent=79 // pred_check
        %p2513 = pneg %p285
      $region82: #{affine_coupling_forward.1} parent=79 // pred_check_branch
        %2515 = sbr.rel (%p2513) target = $region84
      $region83: #{affine_coupling_forward.1} parent=79 // pred_region
        %s2516 = smul.u32 8, %s30
        %p2517 = scmp.lt.s32.totalorder %s29, 1
        %s2518 = scalar_select %p2517, %s29, 1
        %p2519 = scmp.lt.s32.totalorder %s2516, 15
        %s2520 = scalar_select %p2519, %s2516, 15
        %s2521 = smul.addr %s2520, 2
        %s2522 = smul.addr %s2518, 32
        %s2523 = sadd.s32 %s2521, %s2522
        %s2524 = smul.addr %s2523, 8
        %s2525 = scalar_lea.vmem %s10, %s2524
      $region84: #{affine_coupling_forward.1} parent=79 // pred_fallthru
        _
      // Predicated region
      $region85: #{affine_coupling_forward.1} parent=79 // pred_check
        %p2526 = pneg %p313
      $region86: #{affine_coupling_forward.1} parent=79 // pred_check_branch
        %2528 = sbr.rel (%p2526) target = $region88
      $region87: #{affine_coupling_forward.1} parent=79 // pred_region
        %p2529 = scmp.lt.s32.totalorder %s29, 1
        %s2530 = scalar_select %p2529, %s29, 1
        %p2531 = scmp.lt.s32.totalorder %s30, 1
        %s2532 = scalar_select %p2531, %s30, 1
        %s2533 = smul.addr %s2532, 2
        %s2534 = smul.addr %s2530, 4
        %s2535 = sadd.s32 %s2533, %s2534
        %s2536 = smul.addr %s2535, 8
        %s2537 = scalar_lea.vmem %s11, %s2536
      $region88: #{affine_coupling_forward.1} parent=79 // pred_fallthru
        _
    $region80: #{affine_coupling_forward.1} parent=5 // pred_fallthru
      _
  $region6: #{affine_coupling_forward.1} parent=0 // loop_footer
    %s22 = sadd.s32 1, %s18
  $region7: #{affine_coupling_forward.1} parent=0 // loop_footer_branch
    %17 = sbr.rel target = $region3
  $region8: #{affine_coupling_forward.1} parent=0 // loop_exit
    _

</llo_original>
